<compile_context>
chip_gen: v7x
topology: tpu7x:2x2x1
jax: 0.10.0
libtpu: 0.0.40
codegen_flags: <defaults>
</compile_context>

<pallas_src>
import jax
import jax.numpy as jnp
from jax.experimental import pallas as pl
from jax.experimental.pallas import tpu as pltpu

# ---- model dims (small, consistent with the module's constructor) ----
V = 64   # output_dim (vocab size)
E = 16   # emb_dim
H = 32   # hid_dim
L = 2    # n_layers
S = 8    # source sequence length
B = 2    # batch size
T = 4    # decode steps fused into one kernel call

# ---- packed bf16 weight slab [R_TOT, 128]; every block starts on a 16-row boundary ----
R_AH  = 0       # w_attn_h  [H, H]
R_AE  = 32      # w_attn_e  [2H, H]
R_IH0 = 96      # w_ih0     [E+2H, 3H]  (emb rows then ctx rows)
R_HH0 = 176     # w_hh0     [H, 3H]
R_IH1 = 208     # w_ih1     [H, 3H]
R_HH1 = 240     # w_hh1     [H, 3H]
R_OUT = 272     # w_out     [3H+E, V]   (lanes V..128 zero -> lane-dense logits)
R_EMB = 384     # embedding [V, E]
R_TOT = 448


def _gru_cell(gx, gh, h_prev):
    # PyTorch GRU gate order: r, z, n
    r = jax.nn.sigmoid(gx[:, 0:H] + gh[:, 0:H])
    z = jax.nn.sigmoid(gx[:, H:2 * H] + gh[:, H:2 * H])
    n = jnp.tanh(gx[:, 2 * H:3 * H] + r * gh[:, 2 * H:3 * H])
    return (1.0 - z) * n + z * h_prev


def decoder_kernel(ids_ref,     # SMEM [T, B] int32   (scalar prefetch)
                   hid0_ref,    # VMEM [L, B, H] f32  (initial hidden, loaded once)
                   enc_ref,     # VMEM [S, B, 2H] f32 (loaded once)
                   w_ref,       # VMEM [R_TOT, 128] bf16 (loaded once)
                   b_ref,       # VMEM [8, 128] f32 bias slab (loaded once)
                   out_ref,     # VMEM block [1, 8, 128] f32 (per-step lane-dense tile)
                   h_state,     # scratch [L, B, H] f32 : hidden carried across steps
                   enc_proj):   # scratch [S, B, H] f32 : cached enc @ W_attn_e
    f32, bf16 = jnp.float32, jnp.bfloat16
    t = pl.program_id(0)

    # ---- one-time init: seed hidden carry, precompute encoder attention projection ----
    @pl.when(t == 0)
    def _():
        h_state[...] = hid0_ref[...]
        enc_flat = enc_ref[...].reshape(S * B, 2 * H).astype(bf16)
        proj = jnp.dot(enc_flat, w_ref[R_AE:R_AE + 2 * H, 0:H],
                       preferred_element_type=f32)                       # [S*B, H]
        enc_proj[...] = proj.reshape(S, B, H)

    # ---- in-kernel embedding lookup (one-hot MXU matmul on prefetched ids) ----
    lane = jax.lax.broadcasted_iota(jnp.int32, (1, V), 1)
    onehot = jnp.concatenate(
        [(lane == ids_ref[t, b]).astype(bf16) for b in range(B)], axis=0)  # [B, V]
    emb = jnp.dot(onehot, w_ref[R_EMB:R_EMB + V, 0:E],
                  preferred_element_type=f32)                              # [B, E]

    # ---- Bahdanau attention (per-step part only: top hidden projection) ----
    h_top = h_state[L - 1]                                                 # [B, H]
    hid_part = jnp.dot(h_top.astype(bf16), w_ref[R_AH:R_AH + H, 0:H],
                       preferred_element_type=f32)                         # [B, H]
    energy = jnp.tanh(enc_proj[...] + hid_part[None, :, :] + b_ref[0:1, 0:H])  # [S,B,H]
    scores = jnp.sum(energy * b_ref[1:2, 0:H], axis=-1, keepdims=True)     # [S, B, 1]

    # softmax over the source dimension S (exact reciprocal; tiny tensor)
    m = jnp.max(scores, axis=0, keepdims=True)
    e = jnp.exp(scores - m)
    a = e / jnp.sum(e, axis=0, keepdims=True)                              # [S, B, 1]

    # weighted context  ctx[b,:] = sum_s a[s,b] * enc[s,b,:]  (the torch.bmm)
    ctx = jnp.sum(a * enc_ref[...], axis=0)                                # [B, 2H]

    # ---- GRU layer 0 : input = cat(embedded, context), single folded GEMM ----
    h0 = h_state[0]
    xcat = jnp.concatenate([emb, ctx], axis=1)                             # [B, E+2H]
    gx0 = jnp.dot(xcat.astype(bf16), w_ref[R_IH0:R_IH0 + E + 2 * H, 0:3 * H],
                  preferred_element_type=f32) + b_ref[2:3, 0:3 * H]
    gh0 = jnp.dot(h0.astype(bf16), w_ref[R_HH0:R_HH0 + H, 0:3 * H],
                  preferred_element_type=f32) + b_ref[3:4, 0:3 * H]
    h0_new = _gru_cell(gx0, gh0, h0)

    # ---- GRU layer 1 ----
    h1 = h_state[1]
    gx1 = jnp.dot(h0_new.astype(bf16), w_ref[R_IH1:R_IH1 + H, 0:3 * H],
                  preferred_element_type=f32) + b_ref[4:5, 0:3 * H]
    gh1 = jnp.dot(h1.astype(bf16), w_ref[R_HH1:R_HH1 + H, 0:3 * H],
                  preferred_element_type=f32) + b_ref[5:6, 0:3 * H]
    h1_new = _gru_cell(gx1, gh1, h1)

    h_state[0] = h0_new
    h_state[1] = h1_new

    # ---- prediction = Linear(cat(rnn_out, context, embedded)), 128-lane dense ----
    ocat = jnp.concatenate([h1_new, ctx, emb], axis=1)                     # [B, 3H+E]
    pred = jnp.dot(ocat.astype(bf16), w_ref[R_OUT:R_OUT + 3 * H + E, :],
                   preferred_element_type=f32) + b_ref[6:7, :]             # [B, 128]

    # ---- single lane-dense [8,128] output tile per step (unmasked store) ----
    zpad = jnp.zeros((B, 128 - H), f32)
    tile = jnp.concatenate([
        pred,                                            # rows 0 .. B-1    : logits
        jnp.concatenate([h0_new, zpad], axis=1),         # rows 2 .. 2+B-1  : new h0
        jnp.concatenate([h1_new, zpad], axis=1),         # rows 4 .. 4+B-1  : new h1
        jnp.zeros((8 - 3 * B, 128), f32),
    ], axis=0)
    out_ref[0] = tile


def pack_weights(p):
    """Fold split weights back into concatenated GEMM operands, pack weights +
    embedding table into ONE bf16 [R_TOT,128] slab (16-row-aligned blocks) and the
    7 bias rows into one f32 [8,128] tile."""
    w_ih0 = jnp.concatenate([p['w_ih0_e'], p['w_ih0_c']], axis=0)                 # [E+2H,3H]
    w_out = jnp.concatenate([p['w_out_h'], p['w_out_c'], p['w_out_e']], axis=0)   # [3H+E,V]

    slab = jnp.zeros((R_TOT, 128), jnp.float32)

    def put(s, r, arr):
        return s.at[r:r + arr.shape[0], :arr.shape[1]].set(arr.astype(jnp.float32))

    slab = put(slab, R_AH, p['w_attn_h'])
    slab = put(slab, R_AE, p['w_attn_e'])
    slab = put(slab, R_IH0, w_ih0)
    slab = put(slab, R_HH0, p['w_hh0'])
    slab = put(slab, R_IH1, p['w_ih1'])
    slab = put(slab, R_HH1, p['w_hh1'])
    slab = put(slab, R_OUT, w_out)
    slab = put(slab, R_EMB, p['embedding'])
    w_slab = slab.astype(jnp.bfloat16)

    bias = jnp.zeros((8, 128), jnp.float32)
    bias = bias.at[0, :H].set(p['b_attn'][0])
    bias = bias.at[1, :H].set(p['v_attn'][:, 0])
    bias = bias.at[2, :3 * H].set(p['b_ih0'][0])
    bias = bias.at[3, :3 * H].set(p['b_hh0'][0])
    bias = bias.at[4, :3 * H].set(p['b_ih1'][0])
    bias = bias.at[5, :3 * H].set(p['b_hh1'][0])
    bias = bias.at[6, :V].set(p['b_out'][0])
    return w_slab, bias


@jax.jit
def decoder_decode(input_ids, hidden, enc_outputs, w_slab, b_slab):
    """Fused teacher-forced decode over input_ids [T, B]. Returns [T, 8, 128]:
    rows 0:B = logits (lanes 0:V), rows 2:2+B = h0_new, rows 4:4+B = h1_new per step."""
    Tn = input_ids.shape[0]
    grid_spec = pltpu.PrefetchScalarGridSpec(
        num_scalar_prefetch=1,
        grid=(Tn,),
        in_specs=[
            pl.BlockSpec((L, B, H), lambda t, ids: (0, 0, 0)),        # hidden (once)
            pl.BlockSpec((S, B, 2 * H), lambda t, ids: (0, 0, 0)),    # enc (once)
            pl.BlockSpec((R_TOT, 128), lambda t, ids: (0, 0)),        # bf16 weight slab (once)
            pl.BlockSpec((8, 128), lambda t, ids: (0, 0)),            # f32 bias slab (once)
        ],
        out_specs=pl.BlockSpec((1, 8, 128), lambda t, ids: (t, 0, 0)),
        scratch_shapes=[
            pltpu.VMEM((L, B, H), jnp.float32),      # hidden-state carry
            pltpu.VMEM((S, B, H), jnp.float32),      # cached enc @ W_attn_e
        ],
    )
    return pl.pallas_call(
        decoder_kernel,
        out_shape=jax.ShapeDtypeStruct((Tn, 8, 128), jnp.float32),
        grid_spec=grid_spec,
        compiler_params=pltpu.CompilerParams(dimension_semantics=("arbitrary",)),
    )(input_ids.astype(jnp.int32), hidden, enc_outputs, w_slab, b_slab)


def decoder_step(input_ids, hidden, enc_outputs, w_slab, b_slab):
    """Single decode step with the original module's (prediction, hidden) interface."""
    out = decoder_decode(input_ids[None, :], hidden, enc_outputs, w_slab, b_slab)
    pred = out[0, 0:B, :V]
    hid_new = jnp.stack([out[0, 2:2 + B, :H], out[0, 4:4 + B, :H]])
    return pred, hid_new


# ---------------- pure-JAX f32 reference (mirrors the PyTorch forward) ----------------
def decoder_ref_step(input_ids, hidden, enc, p):
    emb = p['embedding'][input_ids]                                         # [B, E]
    h_top = hidden[-1]
    hid_part = h_top @ p['w_attn_h']
    enc_part = jnp.einsum('sbd,dh->sbh', enc, p['w_attn_e'])
    energy = jnp.tanh(hid_part[None] + enc_part + p['b_attn'][None])
    scores = jnp.einsum('sbh,hk->sb', energy, p['v_attn'])
    a = jax.nn.softmax(scores, axis=0)                                      # [S, B]
    ctx = jnp.einsum('sb,sbd->bd', a, enc)                                  # [B, 2H]

    def gru(x, h, w_ih, w_hh, b_ih, b_hh):
        gx = x @ w_ih + b_ih
        gh = h @ w_hh + b_hh
        r = jax.nn.sigmoid(gx[:, :H] + gh[:, :H])
        z = jax.nn.sigmoid(gx[:, H:2 * H] + gh[:, H:2 * H])
        n = jnp.tanh(gx[:, 2 * H:] + r * gh[:, 2 * H:])
        return (1.0 - z) * n + z * h

    x0 = jnp.concatenate([emb, ctx], axis=1)
    w_ih0 = jnp.concatenate([p['w_ih0_e'], p['w_ih0_c']], axis=0)
    h0 = gru(x0, hidden[0], w_ih0, p['w_hh0'], p['b_ih0'], p['b_hh0'])
    h1 = gru(h0, hidden[1], p['w_ih1'], p['w_hh1'], p['b_ih1'], p['b_hh1'])
    out_cat = jnp.concatenate([h1, ctx, emb], axis=1)
    w_out = jnp.concatenate([p['w_out_h'], p['w_out_c'], p['w_out_e']], axis=0)
    pred = out_cat @ w_out + p['b_out']
    return pred, jnp.stack([h0, h1])


def init_params(key):
    ks = jax.random.split(key, 24)

    def rnd(k, shape, scale=0.1):
        return (scale * jax.random.normal(k, shape)).astype(jnp.float32)

    return {
        'embedding': rnd(ks[0], (V, E), 1.0),
        'w_attn_h': rnd(ks[1], (H, H)),
        'w_attn_e': rnd(ks[2], (2 * H, H)),
        'b_attn':   rnd(ks[3], (1, H)),
        'v_attn':   rnd(ks[4], (H, 1)),
        'w_ih0_e': rnd(ks[5], (E, 3 * H)),
        'w_ih0_c': rnd(ks[6], (2 * H, 3 * H)),
        'w_hh0':   rnd(ks[7], (H, 3 * H)),
        'b_ih0':   rnd(ks[8], (1, 3 * H)),
        'b_hh0':   rnd(ks[9], (1, 3 * H)),
        'w_ih1': rnd(ks[10], (H, 3 * H)),
        'w_hh1': rnd(ks[11], (H, 3 * H)),
        'b_ih1': rnd(ks[12], (1, 3 * H)),
        'b_hh1': rnd(ks[13], (1, 3 * H)),
        'w_out_h': rnd(ks[14], (H, V)),
        'w_out_c': rnd(ks[15], (2 * H, V)),
        'w_out_e': rnd(ks[16], (E, V)),
        'b_out':   rnd(ks[17], (1, V)),
    }


if __name__ == "__main__":
    key = jax.random.PRNGKey(0)
    kp, k1, k2, k3 = jax.random.split(key, 4)
    params = init_params(kp)
    w_slab, b_slab = pack_weights(params)   # one-time host-side packing

    ids_seq = jax.random.randint(k1, (T, B), 0, V, dtype=jnp.int32)       # teacher-forced ids
    hidden0 = (0.1 * jax.random.normal(k2, (L, B, H))).astype(jnp.float32)
    enc_outputs = (0.1 * jax.random.normal(k3, (S, B, 2 * H))).astype(jnp.float32)

    # ---- fused multi-step decode (the amortized fast path) ----
    out = jax.block_until_ready(decoder_decode(ids_seq, hidden0, enc_outputs, w_slab, b_slab))
    preds = out[:, 0:B, :V]                                               # [T, B, V]
    hid_final = jnp.stack([out[T - 1, 2:2 + B, :H], out[T - 1, 4:4 + B, :H]])  # [L, B, H]

    # f32 reference: T sequential applications of the module's single-step forward
    h_ref = hidden0
    preds_ref = []
    for t in range(T):
        p_t, h_ref = decoder_ref_step(ids_seq[t], h_ref, enc_outputs, params)
        preds_ref.append(p_t)
    preds_ref = jnp.stack(preds_ref)

    assert preds.shape == (T, B, V) and hid_final.shape == (L, B, H)
    # bf16 weights / matmul inputs in-kernel (per perf review) -> bf16-level tolerance
    assert jnp.allclose(preds, preds_ref, atol=2e-2, rtol=2e-2)
    assert jnp.allclose(hid_final, h_ref, atol=2e-2, rtol=2e-2)

    # ---- single-step interface parity with the original module forward ----
    p1, h1 = decoder_step(ids_seq[0], hidden0, enc_outputs, w_slab, b_slab)
    p1, h1 = jax.block_until_ready((p1, h1))
    p1_ref, h1_ref = decoder_ref_step(ids_seq[0], hidden0, enc_outputs, params)
    assert jnp.allclose(p1, p1_ref, atol=2e-2, rtol=2e-2)
    assert jnp.allclose(h1, h1_ref, atol=2e-2, rtol=2e-2)

    print("KERNEL_OK")
</pallas_src>

<mosaic_0001>
module attributes {stable_mosaic.version = 11 : i64} {
  func.func @decoder_kernel(%arg0: i32, %arg1: memref<4x2xi32, #tpu.memory_space<smem>>, %arg2: memref<2x2x32xf32, #tpu.memory_space<vmem>>, %arg3: memref<8x2x64xf32, #tpu.memory_space<vmem>>, %arg4: memref<448x128xbf16, #tpu.memory_space<vmem>>, %arg5: memref<8x128xf32, #tpu.memory_space<vmem>>, %arg6: memref<1x8x128xf32, #tpu.memory_space<vmem>>, %arg7: memref<2x2x32xf32, #tpu.memory_space<vmem>>, %arg8: memref<8x2x32xf32, #tpu.memory_space<vmem>>) attributes {dimension_semantics = [#tpu.dimension_semantics<arbitrary>], iteration_bounds = array<i64: 4>, scalar_prefetch = 1 : i64, scratch_operands = 2 : i64, tpu.core_type = #tpu.core_type<tc>, window_params = [{pipeline_mode = #tpu.pipeline_mode<synchronous>, transform_indices = @transform_0, window_bounds = array<i64: 2, 2, 32>}, {pipeline_mode = #tpu.pipeline_mode<synchronous>, transform_indices = @transform_1, window_bounds = array<i64: 8, 2, 64>}, {pipeline_mode = #tpu.pipeline_mode<synchronous>, transform_indices = @transform_2, window_bounds = array<i64: 448, 128>}, {pipeline_mode = #tpu.pipeline_mode<synchronous>, transform_indices = @transform_3, window_bounds = array<i64: 8, 128>}, {transform_indices = @transform_4, window_bounds = array<i64: 1, 8, 128>}]} {
    %c0_i32 = arith.constant 0 : i32
    %0 = arith.cmpi eq, %arg0, %c0_i32 : i32
    %1 = arith.extui %0 : i1 to i32
    %c0_i32_0 = arith.constant 0 : i32
    %2 = arith.cmpi ne, %1, %c0_i32_0 : i32
    scf.if %2 {
      %c0_60 = arith.constant 0 : index
      %c0_61 = arith.constant 0 : index
      %c0_62 = arith.constant 0 : index
      %156 = vector.load %arg2[%c0_60, %c0_61, %c0_62] : memref<2x2x32xf32, #tpu.memory_space<vmem>>, vector<2x2x32xf32>
      %c0_63 = arith.constant 0 : index
      %c0_64 = arith.constant 0 : index
      %c0_65 = arith.constant 0 : index
      %157 = vector.load %arg7[%c0_63, %c0_64, %c0_65] : memref<2x2x32xf32, #tpu.memory_space<vmem>>, vector<2x2x32xf32>
      tpu.vector_store %arg7[%c0_63, %c0_64, %c0_65], %156 {strides = array<i32>} : memref<2x2x32xf32, #tpu.memory_space<vmem>>, vector<2x2x32xf32>,
      %c0_66 = arith.constant 0 : index
      %c0_67 = arith.constant 0 : index
      %c0_68 = arith.constant 0 : index
      %158 = vector.load %arg3[%c0_66, %c0_67, %c0_68] : memref<8x2x64xf32, #tpu.memory_space<vmem>>, vector<8x2x64xf32>
      %159 = vector.shape_cast %158 : vector<8x2x64xf32> to vector<16x64xf32>
      %160 = arith.truncf %159 : vector<16x64xf32> to vector<16x64xbf16>
      %c32 = arith.constant 32 : index
      %c0_69 = arith.constant 0 : index
      %161 = vector.load %arg4[%c32, %c0_69] : memref<448x128xbf16, #tpu.memory_space<vmem>>, vector<64x32xbf16>
      %cst_70 = arith.constant dense<0.000000e+00> : vector<16x32xf32>
      %162 = tpu.matmul %160, %161, %cst_70 {dimension_numbers = #tpu.dot_dimension_numbers<[1], [0], [0], [1], [0, 0, 1, 1], [], []>} : vector<16x64xbf16>, vector<64x32xbf16>, vector<16x32xf32> -> vector<16x32xf32>
      %163 = vector.shape_cast %162 : vector<16x32xf32> to vector<8x2x32xf32>
      %c0_71 = arith.constant 0 : index
      %c0_72 = arith.constant 0 : index
      %c0_73 = arith.constant 0 : index
      %164 = vector.load %arg8[%c0_71, %c0_72, %c0_73] : memref<8x2x32xf32, #tpu.memory_space<vmem>>, vector<8x2x32xf32>
      tpu.vector_store %arg8[%c0_71, %c0_72, %c0_73], %163 {strides = array<i32>} : memref<8x2x32xf32, #tpu.memory_space<vmem>>, vector<8x2x32xf32>,
    } else {
    }
    %3 = tpu.iota {dimensions = array<i32: 1>} : vector<1x64xi32>
    %4 = arith.index_cast %arg0 : i32 to index
    %c0 = arith.constant 0 : index
    %5 = memref.load %arg1[%4, %c0] : memref<4x2xi32, #tpu.memory_space<smem>>
    %6 = vector.broadcast %5 : i32 to vector<1x64xi32>
    %7 = arith.cmpi eq, %3, %6 : vector<1x64xi32>
    %8 = arith.extui %7 : vector<1x64xi1> to vector<1x64xi32>
    %9 = arith.sitofp %8 : vector<1x64xi32> to vector<1x64xf32>
    %10 = arith.truncf %9 : vector<1x64xf32> to vector<1x64xbf16>
    %11 = arith.index_cast %arg0 : i32 to index
    %c1 = arith.constant 1 : index
    %12 = memref.load %arg1[%11, %c1] : memref<4x2xi32, #tpu.memory_space<smem>>
    %13 = vector.broadcast %12 : i32 to vector<1x64xi32>
    %14 = arith.cmpi eq, %3, %13 : vector<1x64xi32>
    %15 = arith.extui %14 : vector<1x64xi1> to vector<1x64xi32>
    %16 = arith.sitofp %15 : vector<1x64xi32> to vector<1x64xf32>
    %17 = arith.truncf %16 : vector<1x64xf32> to vector<1x64xbf16>
    %18 = tpu.concatenate %10, %17 in 0 : vector<1x64xbf16>, vector<1x64xbf16> -> vector<2x64xbf16>
    %c384 = arith.constant 384 : index
    %c0_1 = arith.constant 0 : index
    %19 = vector.load %arg4[%c384, %c0_1] : memref<448x128xbf16, #tpu.memory_space<vmem>>, vector<64x16xbf16>
    %cst = arith.constant dense<0.000000e+00> : vector<2x16xf32>
    %20 = tpu.matmul %18, %19, %cst {dimension_numbers = #tpu.dot_dimension_numbers<[1], [0], [0], [1], [0, 0, 1, 1], [], []>} : vector<2x64xbf16>, vector<64x16xbf16>, vector<2x16xf32> -> vector<2x16xf32>
    %c1_2 = arith.constant 1 : index
    %c0_3 = arith.constant 0 : index
    %c0_4 = arith.constant 0 : index
    %21 = vector.load %arg7[%c1_2, %c0_3, %c0_4] : memref<2x2x32xf32, #tpu.memory_space<vmem>>, vector<1x2x32xf32>
    %22 = vector.shape_cast %21 : vector<1x2x32xf32> to vector<2x32xf32>
    %23 = arith.truncf %22 : vector<2x32xf32> to vector<2x32xbf16>
    %c0_5 = arith.constant 0 : index
    %c0_6 = arith.constant 0 : index
    %24 = vector.load %arg4[%c0_5, %c0_6] : memref<448x128xbf16, #tpu.memory_space<vmem>>, vector<32x32xbf16>
    %cst_7 = arith.constant dense<0.000000e+00> : vector<2x32xf32>
    %25 = tpu.matmul %23, %24, %cst_7 {dimension_numbers = #tpu.dot_dimension_numbers<[1], [0], [0], [1], [0, 0, 1, 1], [], []>} : vector<2x32xbf16>, vector<32x32xbf16>, vector<2x32xf32> -> vector<2x32xf32>
    %c0_8 = arith.constant 0 : index
    %c0_9 = arith.constant 0 : index
    %c0_10 = arith.constant 0 : index
    %26 = vector.load %arg8[%c0_8, %c0_9, %c0_10] : memref<8x2x32xf32, #tpu.memory_space<vmem>>, vector<8x2x32xf32>
    %27 = vector.shape_cast %25 : vector<2x32xf32> to vector<1x2x32xf32>
    %28 = vector.broadcast %27 : vector<1x2x32xf32> to vector<8x2x32xf32>
    %29 = arith.addf %26, %28 : vector<8x2x32xf32>
    %c0_11 = arith.constant 0 : index
    %c0_12 = arith.constant 0 : index
    %30 = vector.load %arg5[%c0_11, %c0_12] : memref<8x128xf32, #tpu.memory_space<vmem>>, vector<1x32xf32>
    %31 = vector.shape_cast %30 : vector<1x32xf32> to vector<1x1x32xf32>
    %32 = vector.broadcast %31 : vector<1x1x32xf32> to vector<8x2x32xf32>
    %33 = arith.addf %29, %32 : vector<8x2x32xf32>
    %34 = math.tanh %33 : vector<8x2x32xf32>
    %c1_13 = arith.constant 1 : index
    %c0_14 = arith.constant 0 : index
    %35 = vector.load %arg5[%c1_13, %c0_14] : memref<8x128xf32, #tpu.memory_space<vmem>>, vector<1x32xf32>
    %36 = vector.shape_cast %35 : vector<1x32xf32> to vector<1x1x32xf32>
    %37 = vector.broadcast %36 : vector<1x1x32xf32> to vector<8x2x32xf32>
    %38 = arith.mulf %34, %37 : vector<8x2x32xf32>
    %cst_15 = arith.constant dense<0.000000e+00> : vector<8x2xf32>
    %39 = vector.multi_reduction <add>, %38, %cst_15 [2] : vector<8x2x32xf32> to vector<8x2xf32>
    %40 = vector.shape_cast %39 : vector<8x2xf32> to vector<8x2x1xf32>
    %cst_16 = arith.constant dense<0xFF800000> : vector<2x1xf32>
    %41 = vector.multi_reduction <maximumf>, %40, %cst_16 [0] : vector<8x2x1xf32> to vector<2x1xf32>
    %42 = vector.shape_cast %41 : vector<2x1xf32> to vector<1x2x1xf32>
    %43 = vector.broadcast %42 : vector<1x2x1xf32> to vector<8x2x1xf32>
    %44 = arith.subf %40, %43 : vector<8x2x1xf32>
    %45 = math.exp %44 : vector<8x2x1xf32>
    %cst_17 = arith.constant dense<0.000000e+00> : vector<2x1xf32>
    %46 = vector.multi_reduction <add>, %45, %cst_17 [0] : vector<8x2x1xf32> to vector<2x1xf32>
    %47 = vector.shape_cast %46 : vector<2x1xf32> to vector<1x2x1xf32>
    %48 = vector.broadcast %47 : vector<1x2x1xf32> to vector<8x2x1xf32>
    %49 = arith.divf %45, %48 : vector<8x2x1xf32>
    %c0_18 = arith.constant 0 : index
    %c0_19 = arith.constant 0 : index
    %c0_20 = arith.constant 0 : index
    %50 = vector.load %arg3[%c0_18, %c0_19, %c0_20] : memref<8x2x64xf32, #tpu.memory_space<vmem>>, vector<8x2x64xf32>
    %51 = vector.broadcast %49 : vector<8x2x1xf32> to vector<8x2x64xf32>
    %52 = arith.mulf %51, %50 : vector<8x2x64xf32>
    %cst_21 = arith.constant dense<0.000000e+00> : vector<2x64xf32>
    %53 = vector.multi_reduction <add>, %52, %cst_21 [0] : vector<8x2x64xf32> to vector<2x64xf32>
    %c0_22 = arith.constant 0 : index
    %c0_23 = arith.constant 0 : index
    %c0_24 = arith.constant 0 : index
    %54 = vector.load %arg7[%c0_22, %c0_23, %c0_24] : memref<2x2x32xf32, #tpu.memory_space<vmem>>, vector<1x2x32xf32>
    %55 = vector.shape_cast %54 : vector<1x2x32xf32> to vector<2x32xf32>
    %56 = tpu.concatenate %20, %53 in 1 : vector<2x16xf32>, vector<2x64xf32> -> vector<2x80xf32>
    %57 = arith.truncf %56 : vector<2x80xf32> to vector<2x80xbf16>
    %c96 = arith.constant 96 : index
    %c0_25 = arith.constant 0 : index
    %58 = vector.load %arg4[%c96, %c0_25] : memref<448x128xbf16, #tpu.memory_space<vmem>>, vector<80x96xbf16>
    %cst_26 = arith.constant dense<0.000000e+00> : vector<2x96xf32>
    %59 = tpu.matmul %57, %58, %cst_26 {dimension_numbers = #tpu.dot_dimension_numbers<[1], [0], [0], [1], [0, 0, 1, 1], [], []>} : vector<2x80xbf16>, vector<80x96xbf16>, vector<2x96xf32> -> vector<2x96xf32>
    %c2 = arith.constant 2 : index
    %c0_27 = arith.constant 0 : index
    %60 = vector.load %arg5[%c2, %c0_27] : memref<8x128xf32, #tpu.memory_space<vmem>>, vector<1x96xf32>
    %61 = vector.broadcast %60 : vector<1x96xf32> to vector<2x96xf32>
    %62 = arith.addf %59, %61 : vector<2x96xf32>
    %63 = arith.truncf %55 : vector<2x32xf32> to vector<2x32xbf16>
    %c176 = arith.constant 176 : index
    %c0_28 = arith.constant 0 : index
    %64 = vector.load %arg4[%c176, %c0_28] : memref<448x128xbf16, #tpu.memory_space<vmem>>, vector<32x96xbf16>
    %cst_29 = arith.constant dense<0.000000e+00> : vector<2x96xf32>
    %65 = tpu.matmul %63, %64, %cst_29 {dimension_numbers = #tpu.dot_dimension_numbers<[1], [0], [0], [1], [0, 0, 1, 1], [], []>} : vector<2x32xbf16>, vector<32x96xbf16>, vector<2x96xf32> -> vector<2x96xf32>
    %c3 = arith.constant 3 : index
    %c0_30 = arith.constant 0 : index
    %66 = vector.load %arg5[%c3, %c0_30] : memref<8x128xf32, #tpu.memory_space<vmem>>, vector<1x96xf32>
    %67 = vector.broadcast %66 : vector<1x96xf32> to vector<2x96xf32>
    %68 = arith.addf %65, %67 : vector<2x96xf32>
    %69 = vector.extract_strided_slice %62 {offsets = [0, 0], sizes = [2, 32], strides = [1, 1]} : vector<2x96xf32> to vector<2x32xf32>
    %70 = vector.extract_strided_slice %68 {offsets = [0, 0], sizes = [2, 32], strides = [1, 1]} : vector<2x96xf32> to vector<2x32xf32>
    %71 = arith.addf %69, %70 : vector<2x32xf32>
    %72 = arith.negf %71 : vector<2x32xf32>
    %73 = math.exp %72 : vector<2x32xf32>
    %cst_31 = arith.constant 1.000000e+00 : f32
    %74 = vector.broadcast %cst_31 : f32 to vector<2x32xf32>
    %75 = arith.addf %74, %73 : vector<2x32xf32>
    %76 = arith.divf %74, %75 : vector<2x32xf32>
    %77 = vector.extract_strided_slice %62 {offsets = [0, 32], sizes = [2, 32], strides = [1, 1]} : vector<2x96xf32> to vector<2x32xf32>
    %78 = vector.extract_strided_slice %68 {offsets = [0, 32], sizes = [2, 32], strides = [1, 1]} : vector<2x96xf32> to vector<2x32xf32>
    %79 = arith.addf %77, %78 : vector<2x32xf32>
    %80 = arith.negf %79 : vector<2x32xf32>
    %81 = math.exp %80 : vector<2x32xf32>
    %cst_32 = arith.constant 1.000000e+00 : f32
    %82 = vector.broadcast %cst_32 : f32 to vector<2x32xf32>
    %83 = arith.addf %82, %81 : vector<2x32xf32>
    %84 = arith.divf %82, %83 : vector<2x32xf32>
    %85 = vector.extract_strided_slice %62 {offsets = [0, 64], sizes = [2, 32], strides = [1, 1]} : vector<2x96xf32> to vector<2x32xf32>
    %86 = vector.extract_strided_slice %68 {offsets = [0, 64], sizes = [2, 32], strides = [1, 1]} : vector<2x96xf32> to vector<2x32xf32>
    %87 = arith.mulf %76, %86 : vector<2x32xf32>
    %88 = arith.addf %85, %87 : vector<2x32xf32>
    %89 = math.tanh %88 : vector<2x32xf32>
    %cst_33 = arith.constant 1.000000e+00 : f32
    %90 = vector.broadcast %cst_33 : f32 to vector<2x32xf32>
    %91 = arith.subf %90, %84 : vector<2x32xf32>
    %92 = arith.mulf %91, %89 : vector<2x32xf32>
    %93 = arith.mulf %84, %55 : vector<2x32xf32>
    %94 = arith.addf %92, %93 : vector<2x32xf32>
    %c1_34 = arith.constant 1 : index
    %c0_35 = arith.constant 0 : index
    %c0_36 = arith.constant 0 : index
    %95 = vector.load %arg7[%c1_34, %c0_35, %c0_36] : memref<2x2x32xf32, #tpu.memory_space<vmem>>, vector<1x2x32xf32>
    %96 = vector.shape_cast %95 : vector<1x2x32xf32> to vector<2x32xf32>
    %97 = arith.truncf %94 : vector<2x32xf32> to vector<2x32xbf16>
    %c208 = arith.constant 208 : index
    %c0_37 = arith.constant 0 : index
    %98 = vector.load %arg4[%c208, %c0_37] : memref<448x128xbf16, #tpu.memory_space<vmem>>, vector<32x96xbf16>
    %cst_38 = arith.constant dense<0.000000e+00> : vector<2x96xf32>
    %99 = tpu.matmul %97, %98, %cst_38 {dimension_numbers = #tpu.dot_dimension_numbers<[1], [0], [0], [1], [0, 0, 1, 1], [], []>} : vector<2x32xbf16>, vector<32x96xbf16>, vector<2x96xf32> -> vector<2x96xf32>
    %c4 = arith.constant 4 : index
    %c0_39 = arith.constant 0 : index
    %100 = vector.load %arg5[%c4, %c0_39] : memref<8x128xf32, #tpu.memory_space<vmem>>, vector<1x96xf32>
    %101 = vector.broadcast %100 : vector<1x96xf32> to vector<2x96xf32>
    %102 = arith.addf %99, %101 : vector<2x96xf32>
    %103 = arith.truncf %96 : vector<2x32xf32> to vector<2x32xbf16>
    %c240 = arith.constant 240 : index
    %c0_40 = arith.constant 0 : index
    %104 = vector.load %arg4[%c240, %c0_40] : memref<448x128xbf16, #tpu.memory_space<vmem>>, vector<32x96xbf16>
    %cst_41 = arith.constant dense<0.000000e+00> : vector<2x96xf32>
    %105 = tpu.matmul %103, %104, %cst_41 {dimension_numbers = #tpu.dot_dimension_numbers<[1], [0], [0], [1], [0, 0, 1, 1], [], []>} : vector<2x32xbf16>, vector<32x96xbf16>, vector<2x96xf32> -> vector<2x96xf32>
    %c5 = arith.constant 5 : index
    %c0_42 = arith.constant 0 : index
    %106 = vector.load %arg5[%c5, %c0_42] : memref<8x128xf32, #tpu.memory_space<vmem>>, vector<1x96xf32>
    %107 = vector.broadcast %106 : vector<1x96xf32> to vector<2x96xf32>
    %108 = arith.addf %105, %107 : vector<2x96xf32>
    %109 = vector.extract_strided_slice %102 {offsets = [0, 0], sizes = [2, 32], strides = [1, 1]} : vector<2x96xf32> to vector<2x32xf32>
    %110 = vector.extract_strided_slice %108 {offsets = [0, 0], sizes = [2, 32], strides = [1, 1]} : vector<2x96xf32> to vector<2x32xf32>
    %111 = arith.addf %109, %110 : vector<2x32xf32>
    %112 = arith.negf %111 : vector<2x32xf32>
    %113 = math.exp %112 : vector<2x32xf32>
    %cst_43 = arith.constant 1.000000e+00 : f32
    %114 = vector.broadcast %cst_43 : f32 to vector<2x32xf32>
    %115 = arith.addf %114, %113 : vector<2x32xf32>
    %116 = arith.divf %114, %115 : vector<2x32xf32>
    %117 = vector.extract_strided_slice %102 {offsets = [0, 32], sizes = [2, 32], strides = [1, 1]} : vector<2x96xf32> to vector<2x32xf32>
    %118 = vector.extract_strided_slice %108 {offsets = [0, 32], sizes = [2, 32], strides = [1, 1]} : vector<2x96xf32> to vector<2x32xf32>
    %119 = arith.addf %117, %118 : vector<2x32xf32>
    %120 = arith.negf %119 : vector<2x32xf32>
    %121 = math.exp %120 : vector<2x32xf32>
    %cst_44 = arith.constant 1.000000e+00 : f32
    %122 = vector.broadcast %cst_44 : f32 to vector<2x32xf32>
    %123 = arith.addf %122, %121 : vector<2x32xf32>
    %124 = arith.divf %122, %123 : vector<2x32xf32>
    %125 = vector.extract_strided_slice %102 {offsets = [0, 64], sizes = [2, 32], strides = [1, 1]} : vector<2x96xf32> to vector<2x32xf32>
    %126 = vector.extract_strided_slice %108 {offsets = [0, 64], sizes = [2, 32], strides = [1, 1]} : vector<2x96xf32> to vector<2x32xf32>
    %127 = arith.mulf %116, %126 : vector<2x32xf32>
    %128 = arith.addf %125, %127 : vector<2x32xf32>
    %129 = math.tanh %128 : vector<2x32xf32>
    %cst_45 = arith.constant 1.000000e+00 : f32
    %130 = vector.broadcast %cst_45 : f32 to vector<2x32xf32>
    %131 = arith.subf %130, %124 : vector<2x32xf32>
    %132 = arith.mulf %131, %129 : vector<2x32xf32>
    %133 = arith.mulf %124, %96 : vector<2x32xf32>
    %134 = arith.addf %132, %133 : vector<2x32xf32>
    %c0_46 = arith.constant 0 : index
    %c0_47 = arith.constant 0 : index
    %c0_48 = arith.constant 0 : index
    %135 = vector.load %arg7[%c0_46, %c0_47, %c0_48] : memref<2x2x32xf32, #tpu.memory_space<vmem>>, vector<1x2x32xf32>
    %136 = vector.shape_cast %135 : vector<1x2x32xf32> to vector<2x32xf32>
    %137 = vector.shape_cast %94 : vector<2x32xf32> to vector<1x2x32xf32>
    tpu.vector_store %arg7[%c0_46, %c0_47, %c0_48], %137 {strides = array<i32>} : memref<2x2x32xf32, #tpu.memory_space<vmem>>, vector<1x2x32xf32>,
    %c1_49 = arith.constant 1 : index
    %c0_50 = arith.constant 0 : index
    %c0_51 = arith.constant 0 : index
    %138 = vector.load %arg7[%c1_49, %c0_50, %c0_51] : memref<2x2x32xf32, #tpu.memory_space<vmem>>, vector<1x2x32xf32>
    %139 = vector.shape_cast %138 : vector<1x2x32xf32> to vector<2x32xf32>
    %140 = vector.shape_cast %134 : vector<2x32xf32> to vector<1x2x32xf32>
    tpu.vector_store %arg7[%c1_49, %c0_50, %c0_51], %140 {strides = array<i32>} : memref<2x2x32xf32, #tpu.memory_space<vmem>>, vector<1x2x32xf32>,
    %141 = tpu.concatenate %134, %53, %20 in 1 : vector<2x32xf32>, vector<2x64xf32>, vector<2x16xf32> -> vector<2x112xf32>
    %142 = arith.truncf %141 : vector<2x112xf32> to vector<2x112xbf16>
    %c272 = arith.constant 272 : index
    %c0_52 = arith.constant 0 : index
    %143 = vector.load %arg4[%c272, %c0_52] : memref<448x128xbf16, #tpu.memory_space<vmem>>, vector<112x128xbf16>
    %cst_53 = arith.constant dense<0.000000e+00> : vector<2x128xf32>
    %144 = tpu.matmul %142, %143, %cst_53 {dimension_numbers = #tpu.dot_dimension_numbers<[1], [0], [0], [1], [0, 0, 1, 1], [], []>} : vector<2x112xbf16>, vector<112x128xbf16>, vector<2x128xf32> -> vector<2x128xf32>
    %c6 = arith.constant 6 : index
    %c0_54 = arith.constant 0 : index
    %145 = vector.load %arg5[%c6, %c0_54] : memref<8x128xf32, #tpu.memory_space<vmem>>, vector<1x128xf32>
    %146 = vector.broadcast %145 : vector<1x128xf32> to vector<2x128xf32>
    %147 = arith.addf %144, %146 : vector<2x128xf32>
    %cst_55 = arith.constant 0.000000e+00 : f32
    %148 = vector.broadcast %cst_55 : f32 to vector<2x96xf32>
    %149 = tpu.concatenate %94, %148 in 1 : vector<2x32xf32>, vector<2x96xf32> -> vector<2x128xf32>
    %150 = tpu.concatenate %134, %148 in 1 : vector<2x32xf32>, vector<2x96xf32> -> vector<2x128xf32>
    %cst_56 = arith.constant 0.000000e+00 : f32
    %151 = vector.broadcast %cst_56 : f32 to vector<2x128xf32>
    %152 = tpu.concatenate %147, %149, %150, %151 in 0 : vector<2x128xf32>, vector<2x128xf32>, vector<2x128xf32>, vector<2x128xf32> -> vector<8x128xf32>
    %c0_57 = arith.constant 0 : index
    %c0_58 = arith.constant 0 : index
    %c0_59 = arith.constant 0 : index
    %153 = vector.load %arg6[%c0_57, %c0_58, %c0_59] : memref<1x8x128xf32, #tpu.memory_space<vmem>>, vector<1x8x128xf32>
    %154 = vector.shape_cast %153 : vector<1x8x128xf32> to vector<8x128xf32>
    %155 = vector.shape_cast %152 : vector<8x128xf32> to vector<1x8x128xf32>
    tpu.vector_store %arg6[%c0_57, %c0_58, %c0_59], %155 {strides = array<i32>} : memref<1x8x128xf32, #tpu.memory_space<vmem>>, vector<1x8x128xf32>,
    return
  }
  func.func @transform_0(%arg0: i32, %arg1: memref<4x2xi32, #tpu.memory_space<smem>>) -> (i32, i32, i32) {
    %c0_i32 = arith.constant 0 : i32
    %c0_i32_0 = arith.constant 0 : i32
    %c0_i32_1 = arith.constant 0 : i32
    %c0_i32_2 = arith.constant 0 : i32
    return %c0_i32, %c0_i32_0, %c0_i32_1 : i32, i32, i32
  }
  func.func @transform_1(%arg0: i32, %arg1: memref<4x2xi32, #tpu.memory_space<smem>>) -> (i32, i32, i32) {
    %c0_i32 = arith.constant 0 : i32
    %c0_i32_0 = arith.constant 0 : i32
    %c0_i32_1 = arith.constant 0 : i32
    %c0_i32_2 = arith.constant 0 : i32
    return %c0_i32, %c0_i32_0, %c0_i32_1 : i32, i32, i32
  }
  func.func @transform_2(%arg0: i32, %arg1: memref<4x2xi32, #tpu.memory_space<smem>>) -> (i32, i32) {
    %c0_i32 = arith.constant 0 : i32
    %c0_i32_0 = arith.constant 0 : i32
    %c0_i32_1 = arith.constant 0 : i32
    return %c0_i32, %c0_i32_0 : i32, i32
  }
  func.func @transform_3(%arg0: i32, %arg1: memref<4x2xi32, #tpu.memory_space<smem>>) -> (i32, i32) {
    %c0_i32 = arith.constant 0 : i32
    %c0_i32_0 = arith.constant 0 : i32
    %c0_i32_1 = arith.constant 0 : i32
    return %c0_i32, %c0_i32_0 : i32, i32
  }
  func.func @transform_4(%arg0: i32, %arg1: memref<4x2xi32, #tpu.memory_space<smem>>) -> (i32, i32, i32) {
    %c0_i32 = arith.constant 0 : i32
    %c0_i32_0 = arith.constant 0 : i32
    %c0_i32_1 = arith.constant 0 : i32
    return %arg0, %c0_i32, %c0_i32_0 : i32, i32, i32
  }
}

</mosaic_0001>

<llo_original>
// kernel: decoder_decode.1
$region0: #{decoder_decode.1}
  #allocation0 [shape = 'u32[]', space=smem, size = 0x4, offset = 0x4, fixed_abs, tag = 'smem constant byte address 0x4 - core index']
  #allocation1 [shape = 'u32[144,128]{1,0:T(1,128)}', space=vmem, size = 0x12000, scoped, tag = 'internal scratch']
  #allocation2 [shape = 'f32[2,2,32]{2,1,0:T(2,128)}', space=vmem, size = 0x800, scoped, tag = 'scratch operand']
  #allocation3 [shape = 'f32[8,2,32]{2,1,0:T(2,128)}', space=vmem, size = 0x2000, scoped, tag = 'scratch operand']
  #allocation4 [shape = 's32[1]{0}', space=sflag, size = 0x4, scoped, tag = 'scoped memory for decoder_decode.1']
  #allocation5 [shape = 'u8[2048]{0}', space=smem, size = 0x800, scoped, tag = 'prefetched SMEM operand 0']
  %s0 = inlined_call_operand.vmem [shape: s32[4,2], index: 0, kind: input, shape index: {}]
  %s1 = inlined_call_operand.vmem [shape: f32[2,2,32], index: 1, kind: input, shape index: {}]
  %s2 = inlined_call_operand.hbm [shape: f32[8,2,64], index: 2, kind: input, shape index: {}]
  %s3 = inlined_call_operand.hbm [shape: bf16[448,128], index: 3, kind: input, shape index: {}]
  %s4 = inlined_call_operand.vmem [shape: f32[8,128], index: 4, kind: input, shape index: {}]
  %s5 = inlined_call_operand.hbm [shape: f32[4,8,128], index: 5, kind: output, shape index: {}]
  %s6 = sld [smem:[#allocation0]]
  $region61: #{decoder_decode.1} parent=0
    _
  %s8 = ssub.s32 1, %s6
  %s9 = scalar_select 0, %s8, %s6
  %s10 = sshll.u32 %s0, 4
  %s11 = int_to_ptr.vmem [resolvable:$true] %s10
  %13 = dma.vmem_to_smem %s11, 64, [#allocation5], [#allocation4]
  %14 = dma.done [#allocation4], 64
  %15 = sfence
  $region1: #{decoder_decode.1} parent=0
    #allocation6 [shape = 'u8[8192]{0}', space=vmem, size = 0x2000, scoped, tag = 'input window, operand 2, single buffered']
    #allocation7 [shape = 's32[2]{0}', space=sflag, size = 0x8, scoped, tag = 'scoped memory for decoder_decode.1']
    #allocation8 [shape = 's32[2]{0}', space=sflag, size = 0x8, scoped, tag = 'scoped memory for decoder_decode.1']
    #allocation9 [shape = 'u8[114688]{0}', space=vmem, size = 0x1c000, scoped, tag = 'input window, operand 3, single buffered']
    #allocation10 [shape = 's32[1]{0}', space=sflag, size = 0x4, scoped, tag = 'scoped memory for decoder_decode.1']
    #allocation11 [shape = 'u8[8192]{0}', space=vmem, size = 0x2000, scoped, tag = 'output window, operand 0']
    %16 = vsyncpa [#allocation7], 0
    %17 = vsyncpa [#allocation10], 0
    %18 = vsyncpa [#allocation8], 0
    %s19 = scalar_lea.sflag [#allocation8], 1
    %20 = vsyncpa %s19, 0
    loop: start=0, step=1, limit=6
    $region2: #{decoder_decode.1} parent=1 // loop_pre_header
      _
    $region3: #{decoder_decode.1} parent=1 // loop_header
      %s22 = sphi 0, %s26
      %p23 = scmp.ge.s32.totalorder %s22, 6
      %s30 = sphi 0, %s30
      %s32 = sphi 0, %s30
      %s33 = sphi 0, %s32
      %s47 = sphi 0, %s33
      %s51 = sphi 0, %s51
      %s53 = sphi 0, %s51
      %s54 = sphi 0, %s53
      %s68 = sphi 0, %s54
      %s72 = sphi 0, %s72
      %s74 = sphi 0, %s72
      %s75 = sphi 0, %s74
      %s89 = sphi 0, %s75
      %s93 = sphi 0, %s93
      %s95 = sphi 0, %s93
      %s96 = sphi 0, %s95
      %s110 = sphi 0, %s96
      %s116 = sphi 0, %s118
      %s119 = sphi 0, %s116
      %s120 = sphi 0, %s119
      %s136 = sphi 0, %s120
    $region4: #{decoder_decode.1} parent=1 // loop_header_branch
      %25 = sbr.rel (%p23) target = $region8
    $region5: #{decoder_decode.1} parent=1 // loop_body
      %s27 = ssub.s32 %s22, 1
      %s28 = ssub.s32 %s22, 2
      %s29 = sadd.s32 %s22, 1
      %s31 = sadd.s32 %s30, 1
      %p34 = scmp.eq.s32.totalorder %s22, 3
      %p35 = scmp.ne.s32.totalorder %s30, %s32
      %p36 = scmp.eq.s32.totalorder %s22, 0
      %p37 = por %p35, %p36
      %p38 = scmp.ne.s32.totalorder %s30, %s32
      %p39 = scmp.eq.s32.totalorder %s27, 3
      %p40 = por %p38, %p39
      %p41 = scmp.ne.s32.totalorder %s32, %s33
      %p42 = scmp.eq.s32.totalorder %s27, 0
      %p43 = por %p41, %p42
      %p44 = scmp.ne.s32.totalorder %s32, %s33
      %p45 = scmp.eq.s32.totalorder %s28, 3
      %p46 = por %p44, %p45
      %p48 = scmp.ne.s32.totalorder %s33, %s47
      %p49 = scmp.eq.s32.totalorder %s28, 0
      %p50 = por %p48, %p49
      %s52 = sadd.s32 %s51, 1
      %p55 = scmp.eq.s32.totalorder %s22, 3
      %p56 = scmp.ne.s32.totalorder %s51, %s53
      %p57 = scmp.eq.s32.totalorder %s22, 0
      %p58 = por %p56, %p57
      %p59 = scmp.ne.s32.totalorder %s51, %s53
      %p60 = scmp.eq.s32.totalorder %s27, 3
      %p61 = por %p59, %p60
      %p62 = scmp.ne.s32.totalorder %s53, %s54
      %p63 = scmp.eq.s32.totalorder %s27, 0
      %p64 = por %p62, %p63
      %p65 = scmp.ne.s32.totalorder %s53, %s54
      %p66 = scmp.eq.s32.totalorder %s28, 3
      %p67 = por %p65, %p66
      %p69 = scmp.ne.s32.totalorder %s54, %s68
      %p70 = scmp.eq.s32.totalorder %s28, 0
      %p71 = por %p69, %p70
      %s73 = sadd.s32 %s72, 1
      %p76 = scmp.eq.s32.totalorder %s22, 3
      %p77 = scmp.ne.s32.totalorder %s72, %s74
      %p78 = scmp.eq.s32.totalorder %s22, 0
      %p79 = por %p77, %p78
      %p80 = scmp.ne.s32.totalorder %s72, %s74
      %p81 = scmp.eq.s32.totalorder %s27, 3
      %p82 = por %p80, %p81
      %p83 = scmp.ne.s32.totalorder %s74, %s75
      %p84 = scmp.eq.s32.totalorder %s27, 0
      %p85 = por %p83, %p84
      %p86 = scmp.ne.s32.totalorder %s74, %s75
      %p87 = scmp.eq.s32.totalorder %s28, 3
      %p88 = por %p86, %p87
      %p90 = scmp.ne.s32.totalorder %s75, %s89
      %p91 = scmp.eq.s32.totalorder %s28, 0
      %p92 = por %p90, %p91
      %s94 = sadd.s32 %s93, 1
      %p97 = scmp.eq.s32.totalorder %s22, 3
      %p98 = scmp.ne.s32.totalorder %s93, %s95
      %p99 = scmp.eq.s32.totalorder %s22, 0
      %p100 = por %p98, %p99
      %p101 = scmp.ne.s32.totalorder %s93, %s95
      %p102 = scmp.eq.s32.totalorder %s27, 3
      %p103 = por %p101, %p102
      %p104 = scmp.ne.s32.totalorder %s95, %s96
      %p105 = scmp.eq.s32.totalorder %s27, 0
      %p106 = por %p104, %p105
      %p107 = scmp.ne.s32.totalorder %s95, %s96
      %p108 = scmp.eq.s32.totalorder %s28, 3
      %p109 = por %p107, %p108
      %p111 = scmp.ne.s32.totalorder %s96, %s110
      %p112 = scmp.eq.s32.totalorder %s28, 0
      %p113 = por %p111, %p112
      %s114 = ssub.s32 %s22, %s29
      %p115 = scmp.eq.s32.totalorder %s114, 0
      %s117 = sadd.s32 %s116, 1
      %s118 = scalar_select %p115, %s116, %s117
      %p121 = pneg %p115
      %p122 = scmp.eq.s32.totalorder %s22, 3
      %p123 = por %p121, %p122
      %p124 = scmp.ne.s32.totalorder %s116, %s119
      %p125 = scmp.eq.s32.totalorder %s22, 0
      %p126 = por %p124, %p125
      %p127 = scmp.ne.s32.totalorder %s116, %s119
      %p128 = scmp.eq.s32.totalorder %s27, 3
      %p129 = por %p127, %p128
      %p130 = scmp.ne.s32.totalorder %s119, %s120
      %p131 = scmp.eq.s32.totalorder %s27, 0
      %p132 = por %p130, %p131
      %p133 = scmp.ne.s32.totalorder %s119, %s120
      %p134 = scmp.eq.s32.totalorder %s28, 3
      %p135 = por %p133, %p134
      %p137 = scmp.ne.s32.totalorder %s120, %s136
      %p138 = scmp.eq.s32.totalorder %s28, 0
      %p139 = por %p137, %p138
      %p140 = scmp.le.s32.totalorder 1, %s22
      %p141 = scmp.lt.s32.totalorder %s22, 5
      %p142 = pnand %p140, %p141
      %p143 = pneg %p142
      // Predicated region
      $region9: #{decoder_decode.1} parent=5 // pred_check
        _
      $region10: #{decoder_decode.1} parent=5 // pred_check_branch
        %145 = sbr.rel (%p142) target = $region12
      $region11: #{decoder_decode.1} parent=5 // pred_region
        %s146 = ssub.s32 %s22, 1
        // Predicated region
        $region13: #{decoder_decode.1} parent=11 // pred_check
          %p147 = pneg %p43
        $region14: #{decoder_decode.1} parent=11 // pred_check_branch
          %149 = sbr.rel (%p147) target = $region16
        $region15: #{decoder_decode.1} parent=11 // pred_region
          _
        $region16: #{decoder_decode.1} parent=11 // pred_fallthru
          _
        // Predicated region
        $region17: #{decoder_decode.1} parent=11 // pred_check
          %p150 = pneg %p64
        $region18: #{decoder_decode.1} parent=11 // pred_check_branch
          %152 = sbr.rel (%p150) target = $region20
        $region19: #{decoder_decode.1} parent=11 // pred_region
          %s154 = ssub.s32 256, 256
          %155 = vsyncadd [#allocation7], %s154
          %s156 = sshll.u32 [#allocation6], 4
          %s157 = int_to_ptr.vmem [resolvable:$true] %s156
          %162 = dma.hbm_to_vmem [thread:$0]  %s2, 256, %s157, [#allocation7], 32, 32, 2
        $region20: #{decoder_decode.1} parent=11 // pred_fallthru
          _
        // Predicated region
        $region21: #{decoder_decode.1} parent=11 // pred_check
          %p163 = pneg %p85
        $region22: #{decoder_decode.1} parent=11 // pred_check_branch
          %165 = sbr.rel (%p163) target = $region24
        $region23: #{decoder_decode.1} parent=11 // pred_region
          %s167 = ssub.s32 3584, 3584
          %168 = vsyncadd [#allocation10], %s167
          %s169 = sshll.u32 [#allocation9], 4
          %s170 = int_to_ptr.vmem [resolvable:$true] %s169
          %175 = dma.hbm_to_vmem [thread:$0]  %s3, 3584, %s170, [#allocation10], 64, 64, 4
        $region24: #{decoder_decode.1} parent=11 // pred_fallthru
          _
        // Predicated region
        $region25: #{decoder_decode.1} parent=11 // pred_check
          %p176 = pneg %p106
        $region26: #{decoder_decode.1} parent=11 // pred_check_branch
          %178 = sbr.rel (%p176) target = $region28
        $region27: #{decoder_decode.1} parent=11 // pred_region
          _
        $region28: #{decoder_decode.1} parent=11 // pred_fallthru
          _
      $region12: #{decoder_decode.1} parent=5 // pred_fallthru
        _
      %p179 = scmp.lt.s32.totalorder %s22, 4
      // Predicated region
      $region29: #{decoder_decode.1} parent=5 // pred_check
        %p180 = pneg %p179
      $region30: #{decoder_decode.1} parent=5 // pred_check_branch
        %182 = sbr.rel (%p180) target = $region32
      $region31: #{decoder_decode.1} parent=5 // pred_region
        _
      $region32: #{decoder_decode.1} parent=5 // pred_fallthru
        _
      %p183 = scmp.le.s32.totalorder 1, %s22
      %p184 = scmp.lt.s32.totalorder %s22, 5
      %p185 = pnand %p183, %p184
      %p186 = pneg %p185
      // Predicated region
      $region33: #{decoder_decode.1} parent=5 // pred_check
        _
      $region34: #{decoder_decode.1} parent=5 // pred_check_branch
        %188 = sbr.rel (%p185) target = $region36
      $region35: #{decoder_decode.1} parent=5 // pred_region
        %s189 = ssub.s32 %s22, 1
        // Predicated region
        $region37: #{decoder_decode.1} parent=35 // pred_check
          %p190 = pneg %p64
        $region38: #{decoder_decode.1} parent=35 // pred_check_branch
          %192 = sbr.rel (%p190) target = $region40
        $region39: #{decoder_decode.1} parent=35 // pred_region
          %193 = dma.done [#allocation7], 256
        $region40: #{decoder_decode.1} parent=35 // pred_fallthru
          _
        // Predicated region
        $region41: #{decoder_decode.1} parent=35 // pred_check
          %p194 = pneg %p85
        $region42: #{decoder_decode.1} parent=35 // pred_check_branch
          %196 = sbr.rel (%p194) target = $region44
        $region43: #{decoder_decode.1} parent=35 // pred_region
          %197 = dma.done [#allocation10], 3584
        $region44: #{decoder_decode.1} parent=35 // pred_fallthru
          _
        %p198 = pneg %p43
        %p199 = pneg %p40
        %p200 = pneg %p64
        %p201 = pneg %p61
        %p202 = pneg %p85
        %p203 = pneg %p82
        %p204 = pneg %p106
        %p205 = pneg %p103
        %p206 = pneg %p132
        %p207 = pneg %p129
        %s208 = sand.u32 %s119, 1
        %s209 = scalar_lea.sflag [#allocation8], %s208
        %s210 = sand.u32 %s119, 1
        %s211 = smul.addr %s210, 8
        %s212 = scalar_lea.vmem [#allocation11], %s211
        %p214 = scmp.eq.s32.totalorder %s27, 0
        // Predicated region
        $region45: #{decoder_decode.1} parent=35 // pred_check
          %p215 = pneg %p214
        $region46: #{decoder_decode.1} parent=35 // pred_check_branch
          %217 = sbr.rel (%p215) target = $region48
        $region47: #{decoder_decode.1} parent=35 // pred_region
          %v218 = vld [vmem:[%s1] sm:$0x3]
          %v219 = vld [vmem:[%s1 + $0x2] sm:$0x3]
          %vm220 = vcmask 254976
          %221 = vst.msk [vmem:[#allocation2] sm:$0x3] %vm220, %v218
          %222 = vst.msk [vmem:[#allocation2 + $0x2] sm:$0x3] %vm220, %v219
          %v223 = vld [vmem:[#allocation6] sm:$0x3]
          %v224 = vld [vmem:[#allocation6 + $0x2] sm:$0x3]
          %v225 = vld [vmem:[#allocation6 + $0x4] sm:$0x3]
          %v226 = vld [vmem:[#allocation6 + $0x6] sm:$0x3]
          %v227 = vld [vmem:[#allocation6 + $0x8] sm:$0x3]
          %v228 = vld [vmem:[#allocation6 + $0xa] sm:$0x3]
          %v229 = vld [vmem:[#allocation6 + $0xc] sm:$0x3]
          %v230 = vld [vmem:[#allocation6 + $0xe] sm:$0x3]
          %v239 = vcombine.low %v223, %v224
          %v240 = vcombine.low %v225, %v226
          %v242 = vunpack.c.l.s4 1983009808
          %v243 = vunpack.c.0.s8 %v242
          %v244 = vlaneseq
          %v245 = vshrl.u32 %v244, 7
          %v246 = vsub.s32 %v243, %v245
          %v247 = vrot.slane %v239, %v246
          %v249 = vunpack.c.l.s4 1983009808
          %v250 = vunpack.c.0.s8 %v249
          %v251 = vlaneseq
          %v252 = vshrl.u32 %v251, 7
          %v253 = vsub.s32 %v250, %v252
          %v254 = vrot.slane %v240, %v253
          %v255 = vcombine.low %v247, %v254
          %v256 = vcombine.low %v227, %v228
          %v257 = vcombine.low %v229, %v230
          %v259 = vunpack.c.l.s4 1983009808
          %v260 = vunpack.c.0.s8 %v259
          %v261 = vlaneseq
          %v262 = vshrl.u32 %v261, 7
          %v263 = vsub.s32 %v260, %v262
          %v264 = vrot.slane %v256, %v263
          %v266 = vunpack.c.l.s4 1983009808
          %v267 = vunpack.c.0.s8 %v266
          %v268 = vlaneseq
          %v269 = vshrl.u32 %v268, 7
          %v270 = vsub.s32 %v267, %v269
          %v271 = vrot.slane %v257, %v270
          %v272 = vcombine.low %v264, %v271
          %v275 = vpack.c.bf16 %v272, %v255
          %v276 = vld [vmem:[#allocation9 + $0x10] sm:$0xf]
          %v277 = vld [vmem:[#allocation9 + $0x14] sm:$0xf]
          %v278 = vld [vmem:[#allocation9 + $0x18] sm:$0xf]
          %v279 = vld [vmem:[#allocation9 + $0x1c] sm:$0xf]
          %v280 = vld [vmem:[#allocation9 + $0x20] sm:$0xf]
          %v281 = vld [vmem:[#allocation9 + $0x24] sm:$0xf]
          %v282 = vld [vmem:[#allocation9 + $0x28] sm:$0xf]
          %v283 = vld [vmem:[#allocation9 + $0x2c] sm:$0xf]
          %v292 = vunpack.c.l.b16 %v276
          %v293 = vunpack.c.l.b16 %v277
          %v294 = vunpack.c.l.b16 %v278
          %v295 = vunpack.c.l.b16 %v279
          %v296 = vunpack.c.l.b16 %v280
          %v297 = vunpack.c.l.b16 %v281
          %v298 = vunpack.c.l.b16 %v282
          %v299 = vunpack.c.l.b16 %v283
          %v300 = vpack.c.b16 %v293, %v292
          %v301 = vpack.c.b16 %v295, %v294
          %v302 = vpack.c.b16 %v297, %v296
          %v303 = vpack.c.b16 %v299, %v298
          %vm308 = vcmask 523264
          %v310 = vsel %vm308, %v275, 0
          %312 = vmatprep.subr.bf16.mxu0 0
          %313 = vmatpush1.bf16.msra.mxu0 %v300
          %314 = vmatprep.subr.bf16.mxu0 0
          %315 = vmatpush1.bf16.msra.mxu0 %v301
          %316 = vmatprep.subr.bf16.mxu0 0
          %317 = vmatpush1.bf16.msra.mxu0 %v302
          %318 = vmatprep.subr.bf16.mxu0 0
          %319 = vmatpush1.bf16.msra.mxu0 %v303
          %320 = vmatprep.subr.bf16.mxu0 0
          %321 = vmatpush1.bf16.msra.mxu0 0
          %322 = vmatprep.subr.bf16.mxu0 0
          %323 = vmatpush1.bf16.msra.mxu0 0
          %324 = vmatprep.subr.bf16.mxu0 0
          %325 = vmatpush1.bf16.msra.mxu0 0
          %326 = vmatprep.subr.bf16.mxu0 0
          %327 = vmatpush1.bf16.msra.mxu0 0
          %328 = vmatprep.subr.bf16.mxu0 0
          %329 = vmatpush1.bf16.msra.mxu0 0
          %330 = vmatprep.subr.bf16.mxu0 0
          %331 = vmatpush1.bf16.msra.mxu0 0
          %332 = vmatprep.subr.bf16.mxu0 0
          %333 = vmatpush1.bf16.msra.mxu0 0
          %334 = vmatprep.subr.bf16.mxu0 0
          %335 = vmatpush1.bf16.msra.mxu0 0
          %336 = vmatprep.subr.bf16.mxu0 0
          %337 = vmatpush1.bf16.msra.mxu0 0
          %338 = vmatprep.subr.bf16.mxu0 0
          %339 = vmatpush1.bf16.msra.mxu0 0
          %340 = vmatprep.subr.bf16.mxu0 0
          %341 = vmatpush1.bf16.msra.mxu0 0
          %342 = vmatprep.subr.bf16.mxu0 0
          %343 = vmatpush1.bf16.msra.mxu0 0
          %344 = vmatprep.mubr.bf16.mxu0 0
          %345 = vmatmul.mubr.bf16.gmra.mrb[0].mxu0 %v310
          %v346 = vpop.f32.mrb[0].mxu0
          %v347 = vadd.f32 0.0, %v346
          %v348 = vpop.f32.mrb[0].mxu0
          %v349 = vpop.f32.mrb[0].mxu0
          %v350 = vadd.f32 0.0, %v349
          %v351 = vpop.f32.mrb[0].mxu0
          %352 = vdwg.mxu0
          %v355 = vcombine.high %v347, %v347
          %v357 = vunpack.c.l.s4 1983009808
          %v358 = vunpack.c.0.s8 %v357
          %v359 = vlaneseq
          %v360 = vshrl.u32 %v359, 7
          %v361 = vsub.s32 %v358, %v360
          %v362 = vrot.slane %v347, %v361
          %v364 = vunpack.c.l.s4 1983009808
          %v365 = vunpack.c.0.s8 %v364
          %v366 = vlaneseq
          %v367 = vshrl.u32 %v366, 7
          %v368 = vsub.s32 %v365, %v367
          %v369 = vrot.slane %v355, %v368
          %v370 = vcombine.high %v362, %v362
          %v371 = vcombine.high %v369, %v369
          %v372 = vcombine.high %v350, %v350
          %v374 = vunpack.c.l.s4 1983009808
          %v375 = vunpack.c.0.s8 %v374
          %v376 = vlaneseq
          %v377 = vshrl.u32 %v376, 7
          %v378 = vsub.s32 %v375, %v377
          %v379 = vrot.slane %v350, %v378
          %v381 = vunpack.c.l.s4 1983009808
          %v382 = vunpack.c.0.s8 %v381
          %v383 = vlaneseq
          %v384 = vshrl.u32 %v383, 7
          %v385 = vsub.s32 %v382, %v384
          %v386 = vrot.slane %v372, %v385
          %v387 = vcombine.high %v379, %v379
          %v388 = vcombine.high %v386, %v386
          %397 = vst.msk [vmem:[#allocation3] sm:$0x3] %vm220, %v362
          %398 = vst.msk [vmem:[#allocation3 + $0x2] sm:$0x3] %vm220, %v370
          %399 = vst.msk [vmem:[#allocation3 + $0x4] sm:$0x3] %vm220, %v369
          %400 = vst.msk [vmem:[#allocation3 + $0x6] sm:$0x3] %vm220, %v371
          %401 = vst.msk [vmem:[#allocation3 + $0x8] sm:$0x3] %vm220, %v379
          %402 = vst.msk [vmem:[#allocation3 + $0xa] sm:$0x3] %vm220, %v387
          %403 = vst.msk [vmem:[#allocation3 + $0xc] sm:$0x3] %vm220, %v386
          %404 = vst.msk [vmem:[#allocation3 + $0xe] sm:$0x3] %vm220, %v388
        $region48: #{decoder_decode.1} parent=35 // pred_fallthru
          _
        %v405 = vlaneseq
        %v406 = vand.u32 %v405, 127
        %s407 = smul.u32 %s27, 128
        %s408 = sld [smem:[#allocation5 + %s407]]
        %v409 = vstv %s408
        %vm410 = vcmp.eq.s32.totalorder %v406, %v409
        %v411 = vsel %vm410, 1, 0
        %v412 = vcvt.s32.f32 %v411
        %v413 = vpack.c.bf16 %v412, %v412
        %s414 = sadd.s32 %s407, 1
        %s415 = sld [smem:[#allocation5 + %s414]]
        %v416 = vstv %s415
        %vm417 = vcmp.eq.s32.totalorder %v406, %v416
        %v418 = vsel %vm417, 1, 0
        %v419 = vcvt.s32.f32 %v418
        %v420 = vpack.c.bf16 %v419, %v419
        %vm421 = vcmask 1040384
        %vm422 = vsmask.f32 256
        %vm423 = vmand %vm421, %vm422
        %v424 = vsel %vm423, %v413, %v420
        %v425 = vld [vmem:[#allocation9 + $0xc0] sm:$0xf]
        %v426 = vld [vmem:[#allocation9 + $0xc4] sm:$0xf]
        %v427 = vld [vmem:[#allocation9 + $0xc8] sm:$0xf]
        %v428 = vld [vmem:[#allocation9 + $0xcc] sm:$0xf]
        %v429 = vld [vmem:[#allocation9 + $0xd0] sm:$0xf]
        %v430 = vld [vmem:[#allocation9 + $0xd4] sm:$0xf]
        %v431 = vld [vmem:[#allocation9 + $0xd8] sm:$0xf]
        %v432 = vld [vmem:[#allocation9 + $0xdc] sm:$0xf]
        %v441 = vunpack.c.l.b16 %v425
        %v442 = vunpack.c.l.b16 %v426
        %v443 = vunpack.c.l.b16 %v427
        %v444 = vunpack.c.l.b16 %v428
        %v445 = vunpack.c.l.b16 %v429
        %v446 = vunpack.c.l.b16 %v430
        %v447 = vunpack.c.l.b16 %v431
        %v448 = vunpack.c.l.b16 %v432
        %v449 = vpack.c.b16 %v442, %v441
        %v450 = vpack.c.b16 %v444, %v443
        %v451 = vpack.c.b16 %v446, %v445
        %v452 = vpack.c.b16 %v448, %v447
        %vm457 = vcmask 523264
        %v459 = vsel %vm457, %v424, 0
        %461 = vmatprep.subr.bf16.mxu0 0
        %462 = vmatpush1.bf16.msra.mxu0 %v449
        %463 = vmatprep.subr.bf16.mxu0 0
        %464 = vmatpush1.bf16.msra.mxu0 %v450
        %465 = vmatprep.subr.bf16.mxu0 0
        %466 = vmatpush1.bf16.msra.mxu0 %v451
        %467 = vmatprep.subr.bf16.mxu0 0
        %468 = vmatpush1.bf16.msra.mxu0 %v452
        %469 = vmatprep.subr.bf16.mxu0 0
        %470 = vmatpush1.bf16.msra.mxu0 0
        %471 = vmatprep.subr.bf16.mxu0 0
        %472 = vmatpush1.bf16.msra.mxu0 0
        %473 = vmatprep.subr.bf16.mxu0 0
        %474 = vmatpush1.bf16.msra.mxu0 0
        %475 = vmatprep.subr.bf16.mxu0 0
        %476 = vmatpush1.bf16.msra.mxu0 0
        %477 = vmatprep.subr.bf16.mxu0 0
        %478 = vmatpush1.bf16.msra.mxu0 0
        %479 = vmatprep.subr.bf16.mxu0 0
        %480 = vmatpush1.bf16.msra.mxu0 0
        %481 = vmatprep.subr.bf16.mxu0 0
        %482 = vmatpush1.bf16.msra.mxu0 0
        %483 = vmatprep.subr.bf16.mxu0 0
        %484 = vmatpush1.bf16.msra.mxu0 0
        %485 = vmatprep.subr.bf16.mxu0 0
        %486 = vmatpush1.bf16.msra.mxu0 0
        %487 = vmatprep.subr.bf16.mxu0 0
        %488 = vmatpush1.bf16.msra.mxu0 0
        %489 = vmatprep.subr.bf16.mxu0 0
        %490 = vmatpush1.bf16.msra.mxu0 0
        %491 = vmatprep.subr.bf16.mxu0 0
        %492 = vmatpush1.bf16.msra.mxu0 0
        %493 = vmatprep.mubr.bf16.mxu0 0
        %494 = vmatmul.mubr.bf16.gmra.mrb[0].mxu0 %v459
        %v495 = vpop.f32.mrb[0].mxu0
        %v496 = vadd.f32 0.0, %v495
        %v497 = vpop.f32.mrb[0].mxu0
        %v498 = vpop.f32.mrb[0].mxu0
        %v499 = vpop.f32.mrb[0].mxu0
        %500 = vdwg.mxu0
        %s501 = scalar_lea.vmem [#allocation2], 2
        %v502 = vld [vmem:[%s501] sm:$0x3]
        %v503 = vpack.c.bf16 %v502, %v502
        %v504 = vld [vmem:[#allocation9] sm:$0xf]
        %v505 = vld [vmem:[#allocation9 + $0x4] sm:$0xf]
        %v506 = vld [vmem:[#allocation9 + $0x8] sm:$0xf]
        %v507 = vld [vmem:[#allocation9 + $0xc] sm:$0xf]
        %v512 = vunpack.c.l.b16 %v504
        %v513 = vunpack.c.l.b16 %v505
        %v514 = vunpack.c.l.b16 %v506
        %v515 = vunpack.c.l.b16 %v507
        %v516 = vpack.c.b16 %v513, %v512
        %v517 = vpack.c.b16 %v515, %v514
        %vm520 = vcmask 261120
        %v522 = vsel %vm520, %v503, 0
        %524 = vmatprep.subr.bf16.mxu0 0
        %525 = vmatpush1.bf16.msra.mxu0 %v516
        %526 = vmatprep.subr.bf16.mxu0 0
        %527 = vmatpush1.bf16.msra.mxu0 %v517
        %528 = vmatprep.subr.bf16.mxu0 0
        %529 = vmatpush1.bf16.msra.mxu0 0
        %530 = vmatprep.subr.bf16.mxu0 0
        %531 = vmatpush1.bf16.msra.mxu0 0
        %532 = vmatprep.subr.bf16.mxu0 0
        %533 = vmatpush1.bf16.msra.mxu0 0
        %534 = vmatprep.subr.bf16.mxu0 0
        %535 = vmatpush1.bf16.msra.mxu0 0
        %536 = vmatprep.subr.bf16.mxu0 0
        %537 = vmatpush1.bf16.msra.mxu0 0
        %538 = vmatprep.subr.bf16.mxu0 0
        %539 = vmatpush1.bf16.msra.mxu0 0
        %540 = vmatprep.subr.bf16.mxu0 0
        %541 = vmatpush1.bf16.msra.mxu0 0
        %542 = vmatprep.subr.bf16.mxu0 0
        %543 = vmatpush1.bf16.msra.mxu0 0
        %544 = vmatprep.subr.bf16.mxu0 0
        %545 = vmatpush1.bf16.msra.mxu0 0
        %546 = vmatprep.subr.bf16.mxu0 0
        %547 = vmatpush1.bf16.msra.mxu0 0
        %548 = vmatprep.subr.bf16.mxu0 0
        %549 = vmatpush1.bf16.msra.mxu0 0
        %550 = vmatprep.subr.bf16.mxu0 0
        %551 = vmatpush1.bf16.msra.mxu0 0
        %552 = vmatprep.subr.bf16.mxu0 0
        %553 = vmatpush1.bf16.msra.mxu0 0
        %554 = vmatprep.subr.bf16.mxu0 0
        %555 = vmatpush1.bf16.msra.mxu0 0
        %556 = vmatprep.mubr.bf16.mxu0 0
        %557 = vmatmul.mubr.bf16.gmra.mrb[0].mxu0 %v522
        %v558 = vpop.f32.mrb[0].mxu0
        %v559 = vadd.f32 0.0, %v558
        %v560 = vpop.f32.mrb[0].mxu0
        %v561 = vpop.f32.mrb[0].mxu0
        %v562 = vpop.f32.mrb[0].mxu0
        %563 = vdwg.mxu0
        %v564 = vld [vmem:[#allocation3] sm:$0x3]
        %v565 = vld [vmem:[#allocation3 + $0x2] sm:$0x3]
        %v566 = vld [vmem:[#allocation3 + $0x4] sm:$0x3]
        %v567 = vld [vmem:[#allocation3 + $0x6] sm:$0x3]
        %v568 = vld [vmem:[#allocation3 + $0x8] sm:$0x3]
        %v569 = vld [vmem:[#allocation3 + $0xa] sm:$0x3]
        %v570 = vld [vmem:[#allocation3 + $0xc] sm:$0x3]
        %v571 = vld [vmem:[#allocation3 + $0xe] sm:$0x3]
        %v572 = vadd.f32 %v564, %v559
        %v573 = vadd.f32 %v565, %v559
        %v574 = vadd.f32 %v566, %v559
        %v575 = vadd.f32 %v567, %v559
        %v576 = vadd.f32 %v568, %v559
        %v577 = vadd.f32 %v569, %v559
        %v578 = vadd.f32 %v570, %v559
        %v579 = vadd.f32 %v571, %v559
        %v580 = vld [vmem:[%s4] sm:$0x1]
        %v581 = vlaneseq
        %v582 = vshrl.u32 %v581, 7
        %v583 = vsub.s32 0, %v582
        %v584 = vrot.slane %v580, %v583
        %v585 = vadd.f32 %v572, %v584
        %v586 = vadd.f32 %v573, %v584
        %v587 = vadd.f32 %v574, %v584
        %v588 = vadd.f32 %v575, %v584
        %v589 = vadd.f32 %v576, %v584
        %v590 = vadd.f32 %v577, %v584
        %v591 = vadd.f32 %v578, %v584
        %v592 = vadd.f32 %v579, %v584
        %v593 = vtanh.pop %v585
        %v594 = vtanh.pop %v586
        %v595 = vtanh.pop %v587
        %v596 = vtanh.pop %v588
        %v597 = vtanh.pop %v589
        %v598 = vtanh.pop %v590
        %v599 = vtanh.pop %v591
        %v600 = vtanh.pop %v592
        %v601 = vld [vmem:[%s4 + $0x1] sm:$0x1]
        %v602 = vlaneseq
        %v603 = vshrl.u32 %v602, 7
        %v604 = vsub.s32 0, %v603
        %v605 = vrot.slane %v601, %v604
        %v606 = vmul.f32 %v593, %v605
        %v607 = vmul.f32 %v594, %v605
        %v608 = vmul.f32 %v595, %v605
        %v609 = vmul.f32 %v596, %v605
        %v610 = vmul.f32 %v597, %v605
        %v611 = vmul.f32 %v598, %v605
        %v612 = vmul.f32 %v599, %v605
        %v613 = vmul.f32 %v600, %v605
        %vm614 = vcmask 254976
        %v615 = vsel %vm614, %v606, 0.0
        %616 = vadd.xlane.f32.xlu0 %v615
        %v617 = vpop.xlane.xlu0 %616
        %v618 = vsel %vm614, %v607, 0.0
        %619 = vadd.xlane.f32.xlu0 %v618
        %v620 = vpop.xlane.xlu0 %619
        %v621 = vsel %vm614, %v608, 0.0
        %622 = vadd.xlane.f32.xlu0 %v621
        %v623 = vpop.xlane.xlu0 %622
        %v624 = vsel %vm614, %v609, 0.0
        %625 = vadd.xlane.f32.xlu0 %v624
        %v626 = vpop.xlane.xlu0 %625
        %v627 = vsel %vm614, %v610, 0.0
        %628 = vadd.xlane.f32.xlu0 %v627
        %v629 = vpop.xlane.xlu0 %628
        %v630 = vsel %vm614, %v611, 0.0
        %631 = vadd.xlane.f32.xlu0 %v630
        %v632 = vpop.xlane.xlu0 %631
        %v633 = vsel %vm614, %v612, 0.0
        %634 = vadd.xlane.f32.xlu0 %v633
        %v635 = vpop.xlane.xlu0 %634
        %v636 = vsel %vm614, %v613, 0.0
        %637 = vadd.xlane.f32.xlu0 %v636
        %v638 = vpop.xlane.xlu0 %637
        %vm639 = vcmask 1041408
        %v640 = vsel %vm639, %v617, -inf
        %v641 = vsel %vm639, %v620, -inf
        %v642 = vsel %vm639, %v623, -inf
        %v643 = vsel %vm639, %v626, -inf
        %v644 = vsel %vm639, %v629, -inf
        %v645 = vmax.f32 %v640, %v644
        %v646 = vsel %vm639, %v632, -inf
        %v647 = vmax.f32 %v641, %v646
        %v648 = vsel %vm639, %v635, -inf
        %v649 = vmax.f32 %v642, %v648
        %v650 = vsel %vm639, %v638, -inf
        %v651 = vmax.f32 %v643, %v650
        %v652 = vmax.f32 %v645, %v647
        %v653 = vmax.f32 %v649, %v651
        %v654 = vmax.f32 %v652, %v653
        %v655 = vsub.f32 %v617, %v654
        %v656 = vsub.f32 %v620, %v654
        %v657 = vsub.f32 %v623, %v654
        %v658 = vsub.f32 %v626, %v654
        %v659 = vsub.f32 %v629, %v654
        %v660 = vsub.f32 %v632, %v654
        %v661 = vsub.f32 %v635, %v654
        %v662 = vsub.f32 %v638, %v654
        %v663 = vmul.f32 %v655, 1.442695
        %v664 = vpow.pop %v663
        %v665 = vmul.f32 %v656, 1.442695
        %v666 = vpow.pop %v665
        %v667 = vmul.f32 %v657, 1.442695
        %v668 = vpow.pop %v667
        %v669 = vmul.f32 %v658, 1.442695
        %v670 = vpow.pop %v669
        %v671 = vmul.f32 %v659, 1.442695
        %v672 = vpow.pop %v671
        %v673 = vmul.f32 %v660, 1.442695
        %v674 = vpow.pop %v673
        %v675 = vmul.f32 %v661, 1.442695
        %v676 = vpow.pop %v675
        %v677 = vmul.f32 %v662, 1.442695
        %v678 = vpow.pop %v677
        %v679 = vsel %vm639, %v664, 0.0
        %v680 = vsel %vm639, %v666, 0.0
        %v681 = vadd.f32 %v679, %v680
        %v682 = vsel %vm639, %v668, 0.0
        %v683 = vadd.f32 %v681, %v682
        %v684 = vsel %vm639, %v670, 0.0
        %v685 = vadd.f32 %v683, %v684
        %v686 = vsel %vm639, %v672, 0.0
        %v687 = vadd.f32 %v685, %v686
        %v688 = vsel %vm639, %v674, 0.0
        %v689 = vadd.f32 %v687, %v688
        %v690 = vsel %vm639, %v676, 0.0
        %v691 = vadd.f32 %v689, %v690
        %v692 = vsel %vm639, %v678, 0.0
        %v693 = vadd.f32 %v691, %v692
        %v694 = vrcp.pop %v693
        %v695 = vmul.f32 %v664, %v694
        %v696 = vmul.f32 %v666, %v694
        %v697 = vmul.f32 %v668, %v694
        %v698 = vmul.f32 %v670, %v694
        %v699 = vmul.f32 %v672, %v694
        %v700 = vmul.f32 %v674, %v694
        %v701 = vmul.f32 %v676, %v694
        %v702 = vmul.f32 %v678, %v694
        %v703 = vld [vmem:[#allocation6] sm:$0x3]
        %v704 = vld [vmem:[#allocation6 + $0x2] sm:$0x3]
        %v705 = vld [vmem:[#allocation6 + $0x4] sm:$0x3]
        %v706 = vld [vmem:[#allocation6 + $0x6] sm:$0x3]
        %v707 = vld [vmem:[#allocation6 + $0x8] sm:$0x3]
        %v708 = vld [vmem:[#allocation6 + $0xa] sm:$0x3]
        %v709 = vld [vmem:[#allocation6 + $0xc] sm:$0x3]
        %v710 = vld [vmem:[#allocation6 + $0xe] sm:$0x3]
        %v711 = vmul.f32 %v695, %v703
        %v712 = vmul.f32 %v696, %v704
        %v713 = vmul.f32 %v697, %v705
        %v714 = vmul.f32 %v698, %v706
        %v715 = vmul.f32 %v699, %v707
        %v716 = vmul.f32 %v700, %v708
        %v717 = vmul.f32 %v701, %v709
        %v718 = vmul.f32 %v702, %v710
        %vm719 = vcmask 517120
        %v720 = vsel %vm719, %v711, 0.0
        %v721 = vsel %vm719, %v712, 0.0
        %v722 = vadd.f32 %v720, %v721
        %v723 = vsel %vm719, %v713, 0.0
        %v724 = vadd.f32 %v722, %v723
        %v725 = vsel %vm719, %v714, 0.0
        %v726 = vadd.f32 %v724, %v725
        %v727 = vsel %vm719, %v715, 0.0
        %v728 = vadd.f32 %v726, %v727
        %v729 = vsel %vm719, %v716, 0.0
        %v730 = vadd.f32 %v728, %v729
        %v731 = vsel %vm719, %v717, 0.0
        %v732 = vadd.f32 %v730, %v731
        %v733 = vsel %vm719, %v718, 0.0
        %v734 = vadd.f32 %v732, %v733
        %v735 = vld [vmem:[#allocation2] sm:$0x3]
        %737 = vrot.lane.b32.xlu0 %v734, 16
        %v738 = vpop.permute.xlu0 %737
        %vm740 = vcmask 130048
        %v741 = vsel %vm740, %v496, %v738
        %v742 = vpack.c.bf16 %v741, %v741
        %v743 = vld [vmem:[#allocation9 + $0x30] sm:$0xf]
        %v744 = vld [vmem:[#allocation9 + $0x34] sm:$0xf]
        %v745 = vld [vmem:[#allocation9 + $0x38] sm:$0xf]
        %v746 = vld [vmem:[#allocation9 + $0x3c] sm:$0xf]
        %v747 = vld [vmem:[#allocation9 + $0x40] sm:$0xf]
        %v748 = vld [vmem:[#allocation9 + $0x44] sm:$0xf]
        %v749 = vld [vmem:[#allocation9 + $0x48] sm:$0xf]
        %v750 = vld [vmem:[#allocation9 + $0x4c] sm:$0xf]
        %v751 = vld [vmem:[#allocation9 + $0x50] sm:$0xf]
        %v752 = vld [vmem:[#allocation9 + $0x54] sm:$0xf]
        %v753 = vld [vmem:[%s4 + $0x2] sm:$0x1]
        %v754 = vlaneseq
        %v755 = vshrl.u32 %v754, 7
        %v756 = vsub.s32 0, %v755
        %v757 = vrot.slane %v753, %v756
        %v768 = vunpack.c.l.b16 %v743
        %v769 = vunpack.c.l.b16 %v744
        %v770 = vunpack.c.l.b16 %v745
        %v771 = vunpack.c.l.b16 %v746
        %v772 = vunpack.c.l.b16 %v747
        %v773 = vunpack.c.l.b16 %v748
        %v774 = vunpack.c.l.b16 %v749
        %v775 = vunpack.c.l.b16 %v750
        %v776 = vunpack.c.l.b16 %v751
        %v777 = vunpack.c.l.b16 %v752
        %v778 = vpack.c.b16 %v769, %v768
        %v779 = vpack.c.b16 %v771, %v770
        %v780 = vpack.c.b16 %v773, %v772
        %v781 = vpack.c.b16 %v775, %v774
        %v782 = vpack.c.b16 %v777, %v776
        %vm788 = vcmask 654336
        %v790 = vsel %vm788, %v742, 0
        %792 = vmatprep.subr.bf16.mxu0 0
        %793 = vmatpush1.bf16.msra.mxu0 %v778
        %794 = vmatprep.subr.bf16.mxu0 0
        %795 = vmatpush1.bf16.msra.mxu0 %v779
        %796 = vmatprep.subr.bf16.mxu0 0
        %797 = vmatpush1.bf16.msra.mxu0 %v780
        %798 = vmatprep.subr.bf16.mxu0 0
        %799 = vmatpush1.bf16.msra.mxu0 %v781
        %800 = vmatprep.subr.bf16.mxu0 0
        %801 = vmatpush1.bf16.msra.mxu0 %v782
        %802 = vmatprep.subr.bf16.mxu0 0
        %803 = vmatpush1.bf16.msra.mxu0 0
        %804 = vmatprep.subr.bf16.mxu0 0
        %805 = vmatpush1.bf16.msra.mxu0 0
        %806 = vmatprep.subr.bf16.mxu0 0
        %807 = vmatpush1.bf16.msra.mxu0 0
        %808 = vmatprep.subr.bf16.mxu0 0
        %809 = vmatpush1.bf16.msra.mxu0 0
        %810 = vmatprep.subr.bf16.mxu0 0
        %811 = vmatpush1.bf16.msra.mxu0 0
        %812 = vmatprep.subr.bf16.mxu0 0
        %813 = vmatpush1.bf16.msra.mxu0 0
        %814 = vmatprep.subr.bf16.mxu0 0
        %815 = vmatpush1.bf16.msra.mxu0 0
        %816 = vmatprep.subr.bf16.mxu0 0
        %817 = vmatpush1.bf16.msra.mxu0 0
        %818 = vmatprep.subr.bf16.mxu0 0
        %819 = vmatpush1.bf16.msra.mxu0 0
        %820 = vmatprep.subr.bf16.mxu0 0
        %821 = vmatpush1.bf16.msra.mxu0 0
        %822 = vmatprep.subr.bf16.mxu0 0
        %823 = vmatpush1.bf16.msra.mxu0 0
        %824 = vmatprep.mubr.bf16.mxu0 0
        %825 = vmatmul.mubr.bf16.gmra.mrb[0].mxu0 %v790
        %v826 = vpop.f32.mrb[0].mxu0
        %v827 = vadd.f32 %v757, %v826
        %v828 = vpop.f32.mrb[0].mxu0
        %v829 = vpop.f32.mrb[0].mxu0
        %v830 = vpop.f32.mrb[0].mxu0
        %831 = vdwg.mxu0
        %v832 = vpack.c.bf16 %v735, %v735
        %v833 = vld [vmem:[#allocation9 + $0x58] sm:$0xf]
        %v834 = vld [vmem:[#allocation9 + $0x5c] sm:$0xf]
        %v835 = vld [vmem:[#allocation9 + $0x60] sm:$0xf]
        %v836 = vld [vmem:[#allocation9 + $0x64] sm:$0xf]
        %v837 = vld [vmem:[%s4 + $0x3] sm:$0x1]
        %v838 = vlaneseq
        %v839 = vshrl.u32 %v838, 7
        %v840 = vsub.s32 0, %v839
        %v841 = vrot.slane %v837, %v840
        %v846 = vunpack.c.l.b16 %v833
        %v847 = vunpack.c.l.b16 %v834
        %v848 = vunpack.c.l.b16 %v835
        %v849 = vunpack.c.l.b16 %v836
        %v850 = vpack.c.b16 %v847, %v846
        %v851 = vpack.c.b16 %v849, %v848
        %v855 = vsel %vm520, %v832, 0
        %857 = vmatprep.subr.bf16.mxu0 0
        %858 = vmatpush1.bf16.msra.mxu0 %v850
        %859 = vmatprep.subr.bf16.mxu0 0
        %860 = vmatpush1.bf16.msra.mxu0 %v851
        %861 = vmatprep.subr.bf16.mxu0 0
        %862 = vmatpush1.bf16.msra.mxu0 0
        %863 = vmatprep.subr.bf16.mxu0 0
        %864 = vmatpush1.bf16.msra.mxu0 0
        %865 = vmatprep.subr.bf16.mxu0 0
        %866 = vmatpush1.bf16.msra.mxu0 0
        %867 = vmatprep.subr.bf16.mxu0 0
        %868 = vmatpush1.bf16.msra.mxu0 0
        %869 = vmatprep.subr.bf16.mxu0 0
        %870 = vmatpush1.bf16.msra.mxu0 0
        %871 = vmatprep.subr.bf16.mxu0 0
        %872 = vmatpush1.bf16.msra.mxu0 0
        %873 = vmatprep.subr.bf16.mxu0 0
        %874 = vmatpush1.bf16.msra.mxu0 0
        %875 = vmatprep.subr.bf16.mxu0 0
        %876 = vmatpush1.bf16.msra.mxu0 0
        %877 = vmatprep.subr.bf16.mxu0 0
        %878 = vmatpush1.bf16.msra.mxu0 0
        %879 = vmatprep.subr.bf16.mxu0 0
        %880 = vmatpush1.bf16.msra.mxu0 0
        %881 = vmatprep.subr.bf16.mxu0 0
        %882 = vmatpush1.bf16.msra.mxu0 0
        %883 = vmatprep.subr.bf16.mxu0 0
        %884 = vmatpush1.bf16.msra.mxu0 0
        %885 = vmatprep.subr.bf16.mxu0 0
        %886 = vmatpush1.bf16.msra.mxu0 0
        %887 = vmatprep.subr.bf16.mxu0 0
        %888 = vmatpush1.bf16.msra.mxu0 0
        %889 = vmatprep.mubr.bf16.mxu0 0
        %890 = vmatmul.mubr.bf16.gmra.mrb[0].mxu0 %v855
        %v891 = vpop.f32.mrb[0].mxu0
        %v892 = vadd.f32 %v841, %v891
        %v893 = vpop.f32.mrb[0].mxu0
        %v894 = vpop.f32.mrb[0].mxu0
        %v895 = vpop.f32.mrb[0].mxu0
        %896 = vdwg.mxu0
        %v897 = vadd.f32 %v827, %v892
        %v898 = vxor.u32 %v897, 2147483648
        %v899 = vmul.f32 %v898, 1.442695
        %v900 = vpow.pop %v899
        %v901 = vadd.f32 %v900, 1.0
        %v902 = vrcp.pop %v901
        %v903 = vmul.f32 1.0, %v902
        %905 = vrot.lane.b32.xlu0 %v892, 64
        %v906 = vpop.permute.xlu0 %905
        %v908 = vmul.f32 %v903, %v906
        %910 = vrot.lane.b32.xlu0 %v908, 64
        %v911 = vpop.permute.xlu0 %910
        %v913 = vadd.f32 %v827, %v911
        %v914 = vtanh.pop %v913
        %v915 = vsub.f32 1.0, %v903
        %917 = vrot.lane.b32.xlu0 %v914, 96
        %v918 = vpop.permute.xlu0 %917
        %v920 = vmul.f32 %v915, %v918
        %922 = vrot.lane.b32.xlu0 %v735, 32
        %v923 = vpop.permute.xlu0 %922
        %v925 = vmul.f32 %v903, %v923
        %v926 = vadd.f32 %v920, %v925
        %v927 = vpack.c.bf16 %v926, %v926
        %v928 = vld [vmem:[#allocation9 + $0x68] sm:$0xf]
        %v929 = vld [vmem:[#allocation9 + $0x6c] sm:$0xf]
        %v930 = vld [vmem:[#allocation9 + $0x70] sm:$0xf]
        %v931 = vld [vmem:[#allocation9 + $0x74] sm:$0xf]
        %v932 = vld [vmem:[%s4 + $0x4] sm:$0x1]
        %v933 = vlaneseq
        %v934 = vshrl.u32 %v933, 7
        %v935 = vsub.s32 0, %v934
        %v936 = vrot.slane %v932, %v935
        %938 = vrot.lane.b32.xlu0 %v927, 96
        %v939 = vpop.permute.xlu0 %938
        %v944 = vunpack.c.l.b16 %v928
        %v945 = vunpack.c.l.b16 %v929
        %v946 = vunpack.c.l.b16 %v930
        %v947 = vunpack.c.l.b16 %v931
        %v948 = vpack.c.b16 %v945, %v944
        %v949 = vpack.c.b16 %v947, %v946
        %v953 = vsel %vm520, %v939, 0
        %955 = vmatprep.subr.bf16.mxu0 0
        %956 = vmatpush1.bf16.msra.mxu0 %v948
        %957 = vmatprep.subr.bf16.mxu0 0
        %958 = vmatpush1.bf16.msra.mxu0 %v949
        %959 = vmatprep.subr.bf16.mxu0 0
        %960 = vmatpush1.bf16.msra.mxu0 0
        %961 = vmatprep.subr.bf16.mxu0 0
        %962 = vmatpush1.bf16.msra.mxu0 0
        %963 = vmatprep.subr.bf16.mxu0 0
        %964 = vmatpush1.bf16.msra.mxu0 0
        %965 = vmatprep.subr.bf16.mxu0 0
        %966 = vmatpush1.bf16.msra.mxu0 0
        %967 = vmatprep.subr.bf16.mxu0 0
        %968 = vmatpush1.bf16.msra.mxu0 0
        %969 = vmatprep.subr.bf16.mxu0 0
        %970 = vmatpush1.bf16.msra.mxu0 0
        %971 = vmatprep.subr.bf16.mxu0 0
        %972 = vmatpush1.bf16.msra.mxu0 0
        %973 = vmatprep.subr.bf16.mxu0 0
        %974 = vmatpush1.bf16.msra.mxu0 0
        %975 = vmatprep.subr.bf16.mxu0 0
        %976 = vmatpush1.bf16.msra.mxu0 0
        %977 = vmatprep.subr.bf16.mxu0 0
        %978 = vmatpush1.bf16.msra.mxu0 0
        %979 = vmatprep.subr.bf16.mxu0 0
        %980 = vmatpush1.bf16.msra.mxu0 0
        %981 = vmatprep.subr.bf16.mxu0 0
        %982 = vmatpush1.bf16.msra.mxu0 0
        %983 = vmatprep.subr.bf16.mxu0 0
        %984 = vmatpush1.bf16.msra.mxu0 0
        %985 = vmatprep.subr.bf16.mxu0 0
        %986 = vmatpush1.bf16.msra.mxu0 0
        %987 = vmatprep.mubr.bf16.mxu0 0
        %988 = vmatmul.mubr.bf16.gmra.mrb[0].mxu0 %v953
        %v989 = vpop.f32.mrb[0].mxu0
        %v990 = vadd.f32 %v936, %v989
        %v991 = vpop.f32.mrb[0].mxu0
        %v992 = vpop.f32.mrb[0].mxu0
        %v993 = vpop.f32.mrb[0].mxu0
        %994 = vdwg.mxu0
        %v995 = vld [vmem:[#allocation9 + $0x78] sm:$0xf]
        %v996 = vld [vmem:[#allocation9 + $0x7c] sm:$0xf]
        %v997 = vld [vmem:[#allocation9 + $0x80] sm:$0xf]
        %v998 = vld [vmem:[#allocation9 + $0x84] sm:$0xf]
        %v999 = vld [vmem:[%s4 + $0x5] sm:$0x1]
        %v1000 = vlaneseq
        %v1001 = vshrl.u32 %v1000, 7
        %v1002 = vsub.s32 0, %v1001
        %v1003 = vrot.slane %v999, %v1002
        %v1008 = vunpack.c.l.b16 %v995
        %v1009 = vunpack.c.l.b16 %v996
        %v1010 = vunpack.c.l.b16 %v997
        %v1011 = vunpack.c.l.b16 %v998
        %v1012 = vpack.c.b16 %v1009, %v1008
        %v1013 = vpack.c.b16 %v1011, %v1010
        %1016 = vmatprep.subr.bf16.mxu0 0
        %1017 = vmatpush1.bf16.msra.mxu0 %v1012
        %1018 = vmatprep.subr.bf16.mxu0 0
        %1019 = vmatpush1.bf16.msra.mxu0 %v1013
        %1020 = vmatprep.subr.bf16.mxu0 0
        %1021 = vmatpush1.bf16.msra.mxu0 0
        %1022 = vmatprep.subr.bf16.mxu0 0
        %1023 = vmatpush1.bf16.msra.mxu0 0
        %1024 = vmatprep.subr.bf16.mxu0 0
        %1025 = vmatpush1.bf16.msra.mxu0 0
        %1026 = vmatprep.subr.bf16.mxu0 0
        %1027 = vmatpush1.bf16.msra.mxu0 0
        %1028 = vmatprep.subr.bf16.mxu0 0
        %1029 = vmatpush1.bf16.msra.mxu0 0
        %1030 = vmatprep.subr.bf16.mxu0 0
        %1031 = vmatpush1.bf16.msra.mxu0 0
        %1032 = vmatprep.subr.bf16.mxu0 0
        %1033 = vmatpush1.bf16.msra.mxu0 0
        %1034 = vmatprep.subr.bf16.mxu0 0
        %1035 = vmatpush1.bf16.msra.mxu0 0
        %1036 = vmatprep.subr.bf16.mxu0 0
        %1037 = vmatpush1.bf16.msra.mxu0 0
        %1038 = vmatprep.subr.bf16.mxu0 0
        %1039 = vmatpush1.bf16.msra.mxu0 0
        %1040 = vmatprep.subr.bf16.mxu0 0
        %1041 = vmatpush1.bf16.msra.mxu0 0
        %1042 = vmatprep.subr.bf16.mxu0 0
        %1043 = vmatpush1.bf16.msra.mxu0 0
        %1044 = vmatprep.subr.bf16.mxu0 0
        %1045 = vmatpush1.bf16.msra.mxu0 0
        %1046 = vmatprep.subr.bf16.mxu0 0
        %1047 = vmatpush1.bf16.msra.mxu0 0
        %1048 = vmatprep.mubr.bf16.mxu0 0
        %1049 = vmatmul.mubr.bf16.gmra.mrb[0].mxu0 %v522
        %v1050 = vpop.f32.mrb[0].mxu0
        %v1051 = vadd.f32 %v1003, %v1050
        %v1052 = vpop.f32.mrb[0].mxu0
        %v1053 = vpop.f32.mrb[0].mxu0
        %v1054 = vpop.f32.mrb[0].mxu0
        %1055 = vdwg.mxu0
        %v1056 = vadd.f32 %v990, %v1051
        %v1057 = vxor.u32 %v1056, 2147483648
        %v1058 = vmul.f32 %v1057, 1.442695
        %v1059 = vpow.pop %v1058
        %v1060 = vadd.f32 %v1059, 1.0
        %v1061 = vrcp.pop %v1060
        %v1062 = vmul.f32 1.0, %v1061
        %1064 = vrot.lane.b32.xlu0 %v1051, 64
        %v1065 = vpop.permute.xlu0 %1064
        %v1067 = vmul.f32 %v1062, %v1065
        %1069 = vrot.lane.b32.xlu0 %v1067, 64
        %v1070 = vpop.permute.xlu0 %1069
        %v1072 = vadd.f32 %v990, %v1070
        %v1073 = vtanh.pop %v1072
        %v1074 = vsub.f32 1.0, %v1062
        %1076 = vrot.lane.b32.xlu0 %v1073, 96
        %v1077 = vpop.permute.xlu0 %1076
        %v1079 = vmul.f32 %v1074, %v1077
        %1081 = vrot.lane.b32.xlu0 %v502, 32
        %v1082 = vpop.permute.xlu0 %1081
        %v1084 = vmul.f32 %v1062, %v1082
        %v1085 = vadd.f32 %v1079, %v1084
        %1087 = vrot.lane.b32.xlu0 %v926, 96
        %v1088 = vpop.permute.xlu0 %1087
        %1090 = vst.msk [vmem:[#allocation2] sm:$0x3] %vm614, %v1088
        %1092 = vrot.lane.b32.xlu0 %v1085, 96
        %v1093 = vpop.permute.xlu0 %1092
        %1095 = vst.msk [vmem:[%s501] sm:$0x3] %vm614, %v1093
        %1096 = vrot.lane.b32.xlu0 %v734, 32
        %v1097 = vpop.permute.xlu0 %1096
        %1100 = vrot.lane.b32.xlu0 %v496, 96
        %v1101 = vpop.permute.xlu0 %1100
        %v1103 = vsel %vm520, %v1093, %v1097
        %vm1104 = vcmask 785408
        %v1105 = vsel %vm1104, %v1103, %v1101
        %v1106 = vpack.c.bf16 %v1105, %v1105
        %v1107 = vld [vmem:[#allocation9 + $0x88] sm:$0xf]
        %v1108 = vld [vmem:[#allocation9 + $0x8c] sm:$0xf]
        %v1109 = vld [vmem:[#allocation9 + $0x90] sm:$0xf]
        %v1110 = vld [vmem:[#allocation9 + $0x94] sm:$0xf]
        %v1111 = vld [vmem:[#allocation9 + $0x98] sm:$0xf]
        %v1112 = vld [vmem:[#allocation9 + $0x9c] sm:$0xf]
        %v1113 = vld [vmem:[#allocation9 + $0xa0] sm:$0xf]
        %v1114 = vld [vmem:[#allocation9 + $0xa4] sm:$0xf]
        %v1115 = vld [vmem:[#allocation9 + $0xa8] sm:$0xf]
        %v1116 = vld [vmem:[#allocation9 + $0xac] sm:$0xf]
        %v1117 = vld [vmem:[#allocation9 + $0xb0] sm:$0xf]
        %v1118 = vld [vmem:[#allocation9 + $0xb4] sm:$0xf]
        %v1119 = vld [vmem:[#allocation9 + $0xb8] sm:$0xf]
        %v1120 = vld [vmem:[#allocation9 + $0xbc] sm:$0xf]
        %v1121 = vld [vmem:[%s4 + $0x6] sm:$0x1]
        %v1122 = vlaneseq
        %v1123 = vshrl.u32 %v1122, 7
        %v1124 = vsub.s32 0, %v1123
        %v1125 = vrot.slane %v1121, %v1124
        %v1140 = vunpack.c.l.b16 %v1107
        %v1141 = vunpack.c.l.b16 %v1108
        %v1142 = vunpack.c.l.b16 %v1109
        %v1143 = vunpack.c.l.b16 %v1110
        %v1144 = vunpack.c.l.b16 %v1111
        %v1145 = vunpack.c.l.b16 %v1112
        %v1146 = vunpack.c.l.b16 %v1113
        %v1147 = vunpack.c.l.b16 %v1114
        %v1148 = vunpack.c.l.b16 %v1115
        %v1149 = vunpack.c.l.b16 %v1116
        %v1150 = vunpack.c.l.b16 %v1117
        %v1151 = vunpack.c.l.b16 %v1118
        %v1152 = vunpack.c.l.b16 %v1119
        %v1153 = vunpack.c.l.b16 %v1120
        %v1154 = vpack.c.b16 %v1141, %v1140
        %v1155 = vpack.c.b16 %v1143, %v1142
        %v1156 = vpack.c.b16 %v1145, %v1144
        %v1157 = vpack.c.b16 %v1147, %v1146
        %v1158 = vpack.c.b16 %v1149, %v1148
        %v1159 = vpack.c.b16 %v1151, %v1150
        %v1160 = vpack.c.b16 %v1153, %v1152
        %vm1168 = vcmask 916480
        %v1170 = vsel %vm1168, %v1106, 0
        %1172 = vmatprep.subr.bf16.mxu0 0
        %1173 = vmatpush1.bf16.msra.mxu0 %v1154
        %1174 = vmatprep.subr.bf16.mxu0 0
        %1175 = vmatpush1.bf16.msra.mxu0 %v1155
        %1176 = vmatprep.subr.bf16.mxu0 0
        %1177 = vmatpush1.bf16.msra.mxu0 %v1156
        %1178 = vmatprep.subr.bf16.mxu0 0
        %1179 = vmatpush1.bf16.msra.mxu0 %v1157
        %1180 = vmatprep.subr.bf16.mxu0 0
        %1181 = vmatpush1.bf16.msra.mxu0 %v1158
        %1182 = vmatprep.subr.bf16.mxu0 0
        %1183 = vmatpush1.bf16.msra.mxu0 %v1159
        %1184 = vmatprep.subr.bf16.mxu0 0
        %1185 = vmatpush1.bf16.msra.mxu0 %v1160
        %1186 = vmatprep.subr.bf16.mxu0 0
        %1187 = vmatpush1.bf16.msra.mxu0 0
        %1188 = vmatprep.subr.bf16.mxu0 0
        %1189 = vmatpush1.bf16.msra.mxu0 0
        %1190 = vmatprep.subr.bf16.mxu0 0
        %1191 = vmatpush1.bf16.msra.mxu0 0
        %1192 = vmatprep.subr.bf16.mxu0 0
        %1193 = vmatpush1.bf16.msra.mxu0 0
        %1194 = vmatprep.subr.bf16.mxu0 0
        %1195 = vmatpush1.bf16.msra.mxu0 0
        %1196 = vmatprep.subr.bf16.mxu0 0
        %1197 = vmatpush1.bf16.msra.mxu0 0
        %1198 = vmatprep.subr.bf16.mxu0 0
        %1199 = vmatpush1.bf16.msra.mxu0 0
        %1200 = vmatprep.subr.bf16.mxu0 0
        %1201 = vmatpush1.bf16.msra.mxu0 0
        %1202 = vmatprep.subr.bf16.mxu0 0
        %1203 = vmatpush1.bf16.msra.mxu0 0
        %1204 = vmatprep.mubr.bf16.mxu0 0
        %1205 = vmatmul.mubr.bf16.gmra.mrb[0].mxu0 %v1170
        %v1206 = vpop.f32.mrb[0].mxu0
        %v1207 = vadd.f32 %v1125, %v1206
        %v1208 = vpop.f32.mrb[0].mxu0
        %v1209 = vpop.f32.mrb[0].mxu0
        %v1210 = vpop.f32.mrb[0].mxu0
        %1211 = vdwg.mxu0
        %v1212 = vsel %vm520, %v1088, 0.0
        %v1213 = vsel %vm520, %v1093, 0.0
        %v1215 = vrot.slane %v1212, 6
        %v1218 = vrot.slane %v1213, 4
        %v1220 = vsel %vm639, %v1207, %v1215
        %vm1221 = vcmask 1043456
        %v1222 = vsel %vm1221, %v1220, %v1218
        %vm1223 = vcmask 1045504
        %v1224 = vsel %vm1223, %v1222, 0.0
        %1225 = vst [vmem:[%s212] sm:$0xff] %v1224
        %s1226 = sand.u32 %s119, 1
        %s1227 = scalar_lea.sflag [#allocation8], %s1226
        %s1228 = sand.u32 %s119, 1
        %s1229 = smul.addr %s1228, 8
        %s1230 = scalar_lea.vmem [#allocation11], %s1229
        // Predicated region
        $region49: #{decoder_decode.1} parent=35 // pred_check
          %p1231 = pneg %p129
        $region50: #{decoder_decode.1} parent=35 // pred_check_branch
          %1233 = sbr.rel (%p1231) target = $region52
        $region51: #{decoder_decode.1} parent=35 // pred_region
          %s1235 = ssub.s32 128, 128
          %1236 = vsyncadd %s1227, %s1235
          %s1237 = smul.addr %s27, 128
          %s1238 = scalar_lea.hbm %s5, %s1237
          %s1240 = sshll.u32 %s1230, 4
          %s1241 = int_to_ptr.vmem [resolvable:$true] %s1240
          %1243 = dma.vmem_to_hbm [thread:$0]  %s1241, 128, %s1238, %s1227
        $region52: #{decoder_decode.1} parent=35 // pred_fallthru
          _
      $region36: #{decoder_decode.1} parent=5 // pred_fallthru
        _
      %p1244 = scmp.le.s32.totalorder 2, %s22
      // Predicated region
      $region53: #{decoder_decode.1} parent=5 // pred_check
        %p1245 = pneg %p1244
      $region54: #{decoder_decode.1} parent=5 // pred_check_branch
        %1247 = sbr.rel (%p1245) target = $region56
      $region55: #{decoder_decode.1} parent=5 // pred_region
        %s1248 = ssub.s32 %s22, 2
        // Predicated region
        $region57: #{decoder_decode.1} parent=55 // pred_check
          %p1249 = pneg %p135
        $region58: #{decoder_decode.1} parent=55 // pred_check_branch
          %1251 = sbr.rel (%p1249) target = $region60
        $region59: #{decoder_decode.1} parent=55 // pred_region
          %s1252 = sand.u32 %s120, 1
          %s1253 = scalar_lea.sflag [#allocation8], %s1252
          %s1254 = sand.u32 %s120, 1
          %s1255 = smul.addr %s1254, 8
          %s1256 = scalar_lea.vmem [#allocation11], %s1255
          %1257 = dma.done %s1253, 128
        $region60: #{decoder_decode.1} parent=55 // pred_fallthru
          _
      $region56: #{decoder_decode.1} parent=5 // pred_fallthru
        _
    $region6: #{decoder_decode.1} parent=1 // loop_footer
      %s26 = sadd.s32 1, %s22
    $region7: #{decoder_decode.1} parent=1 // loop_footer_branch
      %21 = sbr.rel target = $region3
    $region8: #{decoder_decode.1} parent=1 // loop_exit
      _
    %1258 = vsyncpa [#allocation7], 1
    %s1259 = scalar_lea.sflag [#allocation7], 1
    %1260 = vsyncpa %s1259, 1
    %1261 = vsyncpa [#allocation10], 1
    %1262 = vsyncpa [#allocation8], 1
    %s1263 = scalar_lea.sflag [#allocation8], 1
    %1264 = vsyncpa %s1263, 1

</llo_original>
